<compile_context>
chip_gen: v6e
topology: v6e:2x2x1
jax: 0.10.0
libtpu: 0.0.40
codegen_flags: <defaults>
</compile_context>

<pallas_src>
import functools

import jax
import jax.numpy as jnp
from jax.experimental import pallas as pl
from jax.experimental.pallas import tpu as pltpu

# ---- model hyper-parameters (small, consistent with the module) ----
D_MODEL = 32
NUM_HEADS = 4
D_FF = 64
SEQ = 8
BATCH = 2
LN_EPS = 1e-5
LANES = 128


def encoder_layer_kernel(x_ref, wa_ref, w1_ref, w2_ref, c_ref, o_ref, *,
                         num_heads, d_model, d_ff, eps):
    """Single invocation (no grid): everything lives in VMEM for the whole call."""
    f32 = jnp.float32
    bf16 = jnp.bfloat16
    dk = d_model // num_heads

    x = x_ref[...]                       # (B*S, D) f32
    xb = x.astype(bf16)
    bs = x.shape[0]                      # B*S (static)

    wa = wa_ref[...]                     # (D, 4*D) bf16: [Wq*scale | Wk | Wv | Wo]
    c = c_ref[...]                       # (8 + B*S, 128) f32 constants slab

    # static slices of the constants slab (every piece starts at lane 0)
    bqkv = c[0:1, 0:3 * d_model]         # (1, 3D)  (q part pre-scaled)
    bo   = c[1:2, 0:d_model]
    b1   = c[2:3, 0:d_ff]
    b2   = c[3:4, 0:d_model]
    g1   = c[4:5, 0:d_model]
    be1  = c[5:6, 0:d_model]
    g2   = c[6:7, 0:d_model]
    be2  = c[7:8, 0:d_model]
    mask_add = c[8:8 + bs, 0:bs]         # (B*S, B*S) additive mask: 0 / -1e30

    # ---------------- fused Q/K/V projection: ONE 128-lane-dense MXU op -------------
    # Columns 3D:4D (x @ Wo) are computed but unused -- free filler on an idle MXU.
    proj = jnp.dot(xb, wa, preferred_element_type=f32)        # (B*S, 4D)
    qkv = proj[:, 0:3 * d_model] + bqkv                       # (B*S, 3D), f32

    # ---------------- per-head attention (block-diagonal across batches) ------------
    ctx_heads = []
    for h in range(num_heads):                                # static, tiny loop
        qh = qkv[:, h * dk:(h + 1) * dk]                      # (B*S, dk)
        kh = qkv[:, d_model + h * dk:d_model + (h + 1) * dk]
        vh = qkv[:, 2 * d_model + h * dk:2 * d_model + (h + 1) * dk]

        # scores: contract dk of q and k (trans_b form), f32 on the idle MXU
        s = jax.lax.dot_general(qh, kh, (((1,), (1,)), ((), ())),
                                preferred_element_type=f32)   # (B*S, B*S)
        s = s + mask_add                                      # kill cross-batch terms
        s = s - jnp.max(s, axis=-1, keepdims=True)            # stable softmax (f32)
        p = jnp.exp(s)
        p = p * pl.reciprocal(jnp.sum(p, axis=-1, keepdims=True), approx=True)

        # probabilities kept in f32 for the ctx matmul (accuracy; MXU is idle)
        ctx_heads.append(jnp.dot(p, vh, preferred_element_type=f32))   # (B*S, dk)

    ctx = jnp.concatenate(ctx_heads, axis=-1)                 # (B*S, D), lane concat

    # ---------------- single output projection --------------------------------------
    wo = wa[:, 3 * d_model:4 * d_model]                       # (D, D) bf16
    attn = jnp.dot(ctx.astype(bf16), wo, preferred_element_type=f32) + bo

    # ---------------- add & norm 1 (dropout == identity in eval) --------------------
    h1 = x + attn
    mu1 = jnp.mean(h1, axis=-1, keepdims=True)
    var1 = jnp.mean(jnp.square(h1 - mu1), axis=-1, keepdims=True)
    h1 = (h1 - mu1) * jax.lax.rsqrt(var1 + eps) * g1 + be1

    # ---------------- position-wise feed-forward -------------------------------------
    ff = jnp.dot(h1.astype(bf16), w1_ref[...], preferred_element_type=f32) + b1
    ff = jnp.maximum(ff, 0.0)                                 # ReLU
    ff = jnp.dot(ff.astype(bf16), w2_ref[...], preferred_element_type=f32) + b2

    # ---------------- add & norm 2 ----------------------------------------------------
    h2 = h1 + ff
    mu2 = jnp.mean(h2, axis=-1, keepdims=True)
    var2 = jnp.mean(jnp.square(h2 - mu2), axis=-1, keepdims=True)
    h2 = (h2 - mu2) * jax.lax.rsqrt(var2 + eps) * g2 + be2

    # direct (B*S, D) store: only 2 output vregs, masked stores are cheaper than
    # the cross-vreg lane repack a (B, S*D) reshape would require.
    o_ref[...] = h2.astype(o_ref.dtype)


def pack_params(params, batch, seq, num_heads=NUM_HEADS):
    """One-time host-side packing (hoisted out of the jitted forward).

    Returns 4 packed operands:
      w_attn : (D, 4D) bf16   [Wq*scale | Wk | Wv | Wo]
      w1     : (D, D_FF) bf16
      w2     : (D_FF, D) bf16
      consts : (8 + B*S, 128) f32  biases / LN params / additive block-diag mask
    """
    D = params["wq"].shape[0]
    dk = D // num_heads
    scale = float(dk) ** -0.5
    bs = batch * seq
    bf16 = jnp.bfloat16

    w_attn = jnp.concatenate(
        [params["wq"] * scale, params["wk"], params["wv"], params["wo"]],
        axis=1).astype(bf16)                                   # (D, 4D)

    def row(v):
        v = jnp.asarray(v, jnp.float32).reshape(-1)
        return jnp.pad(v, (0, LANES - v.shape[0]))

    bqkv = jnp.concatenate([params["bq"].reshape(-1) * scale,
                            params["bk"].reshape(-1),
                            params["bv"].reshape(-1)])
    rows = jnp.stack([row(bqkv), row(params["bo"]), row(params["b1"]),
                      row(params["b2"]), row(params["g1"]), row(params["be1"]),
                      row(params["g2"]), row(params["be2"])])  # (8, 128)

    ids = jnp.arange(bs) // seq
    mask = jnp.where(ids[:, None] == ids[None, :], 0.0, -1e30).astype(jnp.float32)
    mask = jnp.pad(mask, ((0, 0), (0, LANES - bs)))            # (B*S, 128)

    consts = jnp.concatenate([rows, mask], axis=0)             # (8 + B*S, 128)

    return {
        "w_attn": w_attn,
        "w1": params["w1"].astype(bf16),
        "w2": params["w2"].astype(bf16),
        "consts": consts,
    }


@jax.jit
def encoder_layer(x, packed):
    B, S, D = x.shape
    bs = B * S
    x2 = x.reshape(bs, D)

    kernel = functools.partial(encoder_layer_kernel, num_heads=NUM_HEADS,
                               d_model=D, d_ff=D_FF, eps=LN_EPS)

    vmem_spec = pl.BlockSpec(memory_space=pltpu.MemorySpace.VMEM)

    # No grid: the whole problem fits trivially in VMEM on v5e/v6e/v7x; a single
    # invocation avoids per-step overhead, and sharding across v7x's two
    # TensorCores at 16 rows would be a regression.
    out = pl.pallas_call(
        kernel,
        out_shape=jax.ShapeDtypeStruct((bs, D), x.dtype),
        in_specs=[vmem_spec] * 5,
        out_specs=vmem_spec,
        cost_estimate=pl.CostEstimate(flops=400_000,
                                      transcendentals=bs * bs * NUM_HEADS,
                                      bytes_accessed=20_000),
    )(x2, packed["w_attn"], packed["w1"], packed["w2"], packed["consts"])

    return out.reshape(B, S, D)


# ---------------- pure-JAX f32 reference (sanity check) ----------------
def ref_forward(x, p):
    B, S, D = x.shape
    H, dk = NUM_HEADS, D // NUM_HEADS

    q = x @ p["wq"] + p["bq"][0]
    k = x @ p["wk"] + p["bk"][0]
    v = x @ p["wv"] + p["bv"][0]
    qh = q.reshape(B, S, H, dk).transpose(0, 2, 1, 3)
    kh = k.reshape(B, S, H, dk).transpose(0, 2, 1, 3)
    vh = v.reshape(B, S, H, dk).transpose(0, 2, 1, 3)
    s = jnp.einsum("bhqd,bhkd->bhqk", qh, kh) / jnp.sqrt(jnp.float32(dk))
    pr = jax.nn.softmax(s, axis=-1)
    a = jnp.einsum("bhqk,bhkd->bhqd", pr, vh).transpose(0, 2, 1, 3).reshape(B, S, D)
    a = a @ p["wo"] + p["bo"][0]

    def ln(y, g, b):
        mu = y.mean(-1, keepdims=True)
        var = ((y - mu) ** 2).mean(-1, keepdims=True)
        return (y - mu) / jnp.sqrt(var + LN_EPS) * g[0] + b[0]

    h1 = ln(x + a, p["g1"], p["be1"])
    ff = jnp.maximum(h1 @ p["w1"] + p["b1"][0], 0.0) @ p["w2"] + p["b2"][0]
    return ln(h1 + ff, p["g2"], p["be2"])


def init_params(key):
    def linear(k, din, dout):
        kw, kb = jax.random.split(k)
        w = jax.random.normal(kw, (din, dout), jnp.float32) / jnp.sqrt(jnp.float32(din))
        b = 0.01 * jax.random.normal(kb, (1, dout), jnp.float32)
        return w, b

    ks = jax.random.split(key, 6)
    wq, bq = linear(ks[0], D_MODEL, D_MODEL)
    wk, bk = linear(ks[1], D_MODEL, D_MODEL)
    wv, bv = linear(ks[2], D_MODEL, D_MODEL)
    wo, bo = linear(ks[3], D_MODEL, D_MODEL)
    w1, b1 = linear(ks[4], D_MODEL, D_FF)
    w2, b2 = linear(ks[5], D_FF, D_MODEL)
    return {
        "wq": wq, "bq": bq, "wk": wk, "bk": bk, "wv": wv, "bv": bv,
        "wo": wo, "bo": bo, "w1": w1, "b1": b1, "w2": w2, "b2": b2,
        # LayerNorm params: PyTorch default init (gamma=1, beta=0)
        "g1": jnp.ones((1, D_MODEL), jnp.float32),
        "be1": jnp.zeros((1, D_MODEL), jnp.float32),
        "g2": jnp.ones((1, D_MODEL), jnp.float32),
        "be2": jnp.zeros((1, D_MODEL), jnp.float32),
    }


if __name__ == "__main__":
    key = jax.random.PRNGKey(0)
    k_x, k_p = jax.random.split(key)
    x = jax.random.normal(k_x, (BATCH, SEQ, D_MODEL), jnp.float32)
    params = init_params(k_p)

    # One-time parameter packing (hoisted out of the per-call jitted forward).
    packed = pack_params(params, BATCH, SEQ)
    packed = {k: jax.block_until_ready(v) for k, v in packed.items()}

    out = jax.block_until_ready(encoder_layer(x, packed))
    ref = jax.block_until_ready(ref_forward(x, params))

    assert out.shape == (BATCH, SEQ, D_MODEL)
    # Tolerance is a precision choice: weights feed the MXU as bf16 (f32 accumulate)
    # and the softmax denominator uses the approximate EUP reciprocal.
    max_diff = float(jnp.max(jnp.abs(out - ref)))
    assert jnp.allclose(out, ref, atol=5e-2, rtol=5e-2), (
        f"kernel output mismatch vs reference (max abs diff {max_diff})")

    print("KERNEL_OK")
</pallas_src>

<mosaic_0001>
module attributes {stable_mosaic.version = 11 : i64} {
  func.func @encoder_layer_kernel(%arg0: memref<16x32xf32, #tpu.memory_space<vmem>>, %arg1: memref<32x128xbf16, #tpu.memory_space<vmem>>, %arg2: memref<32x64xbf16, #tpu.memory_space<vmem>>, %arg3: memref<64x32xbf16, #tpu.memory_space<vmem>>, %arg4: memref<24x128xf32, #tpu.memory_space<vmem>>, %arg5: memref<16x32xf32, #tpu.memory_space<vmem>>) attributes {dimension_semantics = [], scalar_prefetch = 0 : i64, scratch_operands = 0 : i64, tpu.core_type = #tpu.core_type<tc>} {
    %c0 = arith.constant 0 : index
    %c0_0 = arith.constant 0 : index
    %0 = vector.load %arg0[%c0, %c0_0] : memref<16x32xf32, #tpu.memory_space<vmem>>, vector<16x32xf32>
    %1 = arith.truncf %0 : vector<16x32xf32> to vector<16x32xbf16>
    %c0_1 = arith.constant 0 : index
    %c0_2 = arith.constant 0 : index
    %2 = vector.load %arg1[%c0_1, %c0_2] : memref<32x128xbf16, #tpu.memory_space<vmem>>, vector<32x128xbf16>
    %c0_3 = arith.constant 0 : index
    %c0_4 = arith.constant 0 : index
    %3 = vector.load %arg4[%c0_3, %c0_4] : memref<24x128xf32, #tpu.memory_space<vmem>>, vector<24x128xf32>
    %4 = vector.extract_strided_slice %3 {offsets = [0, 0], sizes = [1, 96], strides = [1, 1]} : vector<24x128xf32> to vector<1x96xf32>
    %5 = vector.extract_strided_slice %3 {offsets = [1, 0], sizes = [1, 32], strides = [1, 1]} : vector<24x128xf32> to vector<1x32xf32>
    %6 = vector.extract_strided_slice %3 {offsets = [2, 0], sizes = [1, 64], strides = [1, 1]} : vector<24x128xf32> to vector<1x64xf32>
    %7 = vector.extract_strided_slice %3 {offsets = [3, 0], sizes = [1, 32], strides = [1, 1]} : vector<24x128xf32> to vector<1x32xf32>
    %8 = vector.extract_strided_slice %3 {offsets = [4, 0], sizes = [1, 32], strides = [1, 1]} : vector<24x128xf32> to vector<1x32xf32>
    %9 = vector.extract_strided_slice %3 {offsets = [5, 0], sizes = [1, 32], strides = [1, 1]} : vector<24x128xf32> to vector<1x32xf32>
    %10 = vector.extract_strided_slice %3 {offsets = [6, 0], sizes = [1, 32], strides = [1, 1]} : vector<24x128xf32> to vector<1x32xf32>
    %11 = vector.extract_strided_slice %3 {offsets = [7, 0], sizes = [1, 32], strides = [1, 1]} : vector<24x128xf32> to vector<1x32xf32>
    %12 = vector.extract_strided_slice %3 {offsets = [8, 0], sizes = [16, 16], strides = [1, 1]} : vector<24x128xf32> to vector<16x16xf32>
    %cst = arith.constant dense<0.000000e+00> : vector<16x128xf32>
    %13 = tpu.matmul %1, %2, %cst {dimension_numbers = #tpu.dot_dimension_numbers<[1], [0], [0], [1], [0, 0, 1, 1], [], []>} : vector<16x32xbf16>, vector<32x128xbf16>, vector<16x128xf32> -> vector<16x128xf32>
    %14 = vector.extract_strided_slice %13 {offsets = [0, 0], sizes = [16, 96], strides = [1, 1]} : vector<16x128xf32> to vector<16x96xf32>
    %15 = vector.broadcast %4 : vector<1x96xf32> to vector<16x96xf32>
    %16 = arith.addf %14, %15 : vector<16x96xf32>
    %17 = vector.extract_strided_slice %16 {offsets = [0, 0], sizes = [16, 8], strides = [1, 1]} : vector<16x96xf32> to vector<16x8xf32>
    %18 = vector.extract_strided_slice %16 {offsets = [0, 32], sizes = [16, 8], strides = [1, 1]} : vector<16x96xf32> to vector<16x8xf32>
    %19 = vector.extract_strided_slice %16 {offsets = [0, 64], sizes = [16, 8], strides = [1, 1]} : vector<16x96xf32> to vector<16x8xf32>
    %cst_5 = arith.constant dense<0.000000e+00> : vector<16x16xf32>
    %20 = tpu.matmul %17, %18, %cst_5 {dimension_numbers = #tpu.dot_dimension_numbers<[1], [1], [0], [0], [0, 0, 1, 0], [], []>} : vector<16x8xf32>, vector<16x8xf32>, vector<16x16xf32> -> vector<16x16xf32>
    %21 = arith.addf %20, %12 : vector<16x16xf32>
    %cst_6 = arith.constant dense<0xFF800000> : vector<16xf32>
    %22 = vector.multi_reduction <maximumf>, %21, %cst_6 [1] : vector<16x16xf32> to vector<16xf32>
    %23 = vector.shape_cast %22 : vector<16xf32> to vector<16x1xf32>
    %24 = vector.broadcast %23 : vector<16x1xf32> to vector<16x16xf32>
    %25 = arith.subf %21, %24 : vector<16x16xf32>
    %26 = math.exp %25 : vector<16x16xf32>
    %cst_7 = arith.constant dense<0.000000e+00> : vector<16xf32>
    %27 = vector.multi_reduction <add>, %26, %cst_7 [1] : vector<16x16xf32> to vector<16xf32>
    %28 = vector.shape_cast %27 : vector<16xf32> to vector<16x1xf32>
    %29 = tpu.reciprocal %28 {approx = true} : vector<16x1xf32> -> vector<16x1xf32>
    %30 = vector.broadcast %29 : vector<16x1xf32> to vector<16x16xf32>
    %31 = arith.mulf %26, %30 : vector<16x16xf32>
    %cst_8 = arith.constant dense<0.000000e+00> : vector<16x8xf32>
    %32 = tpu.matmul %31, %19, %cst_8 {dimension_numbers = #tpu.dot_dimension_numbers<[1], [0], [0], [1], [0, 0, 1, 1], [], []>} : vector<16x16xf32>, vector<16x8xf32>, vector<16x8xf32> -> vector<16x8xf32>
    %33 = vector.extract_strided_slice %16 {offsets = [0, 8], sizes = [16, 8], strides = [1, 1]} : vector<16x96xf32> to vector<16x8xf32>
    %34 = vector.extract_strided_slice %16 {offsets = [0, 40], sizes = [16, 8], strides = [1, 1]} : vector<16x96xf32> to vector<16x8xf32>
    %35 = vector.extract_strided_slice %16 {offsets = [0, 72], sizes = [16, 8], strides = [1, 1]} : vector<16x96xf32> to vector<16x8xf32>
    %cst_9 = arith.constant dense<0.000000e+00> : vector<16x16xf32>
    %36 = tpu.matmul %33, %34, %cst_9 {dimension_numbers = #tpu.dot_dimension_numbers<[1], [1], [0], [0], [0, 0, 1, 0], [], []>} : vector<16x8xf32>, vector<16x8xf32>, vector<16x16xf32> -> vector<16x16xf32>
    %37 = arith.addf %36, %12 : vector<16x16xf32>
    %cst_10 = arith.constant dense<0xFF800000> : vector<16xf32>
    %38 = vector.multi_reduction <maximumf>, %37, %cst_10 [1] : vector<16x16xf32> to vector<16xf32>
    %39 = vector.shape_cast %38 : vector<16xf32> to vector<16x1xf32>
    %40 = vector.broadcast %39 : vector<16x1xf32> to vector<16x16xf32>
    %41 = arith.subf %37, %40 : vector<16x16xf32>
    %42 = math.exp %41 : vector<16x16xf32>
    %cst_11 = arith.constant dense<0.000000e+00> : vector<16xf32>
    %43 = vector.multi_reduction <add>, %42, %cst_11 [1] : vector<16x16xf32> to vector<16xf32>
    %44 = vector.shape_cast %43 : vector<16xf32> to vector<16x1xf32>
    %45 = tpu.reciprocal %44 {approx = true} : vector<16x1xf32> -> vector<16x1xf32>
    %46 = vector.broadcast %45 : vector<16x1xf32> to vector<16x16xf32>
    %47 = arith.mulf %42, %46 : vector<16x16xf32>
    %cst_12 = arith.constant dense<0.000000e+00> : vector<16x8xf32>
    %48 = tpu.matmul %47, %35, %cst_12 {dimension_numbers = #tpu.dot_dimension_numbers<[1], [0], [0], [1], [0, 0, 1, 1], [], []>} : vector<16x16xf32>, vector<16x8xf32>, vector<16x8xf32> -> vector<16x8xf32>
    %49 = vector.extract_strided_slice %16 {offsets = [0, 16], sizes = [16, 8], strides = [1, 1]} : vector<16x96xf32> to vector<16x8xf32>
    %50 = vector.extract_strided_slice %16 {offsets = [0, 48], sizes = [16, 8], strides = [1, 1]} : vector<16x96xf32> to vector<16x8xf32>
    %51 = vector.extract_strided_slice %16 {offsets = [0, 80], sizes = [16, 8], strides = [1, 1]} : vector<16x96xf32> to vector<16x8xf32>
    %cst_13 = arith.constant dense<0.000000e+00> : vector<16x16xf32>
    %52 = tpu.matmul %49, %50, %cst_13 {dimension_numbers = #tpu.dot_dimension_numbers<[1], [1], [0], [0], [0, 0, 1, 0], [], []>} : vector<16x8xf32>, vector<16x8xf32>, vector<16x16xf32> -> vector<16x16xf32>
    %53 = arith.addf %52, %12 : vector<16x16xf32>
    %cst_14 = arith.constant dense<0xFF800000> : vector<16xf32>
    %54 = vector.multi_reduction <maximumf>, %53, %cst_14 [1] : vector<16x16xf32> to vector<16xf32>
    %55 = vector.shape_cast %54 : vector<16xf32> to vector<16x1xf32>
    %56 = vector.broadcast %55 : vector<16x1xf32> to vector<16x16xf32>
    %57 = arith.subf %53, %56 : vector<16x16xf32>
    %58 = math.exp %57 : vector<16x16xf32>
    %cst_15 = arith.constant dense<0.000000e+00> : vector<16xf32>
    %59 = vector.multi_reduction <add>, %58, %cst_15 [1] : vector<16x16xf32> to vector<16xf32>
    %60 = vector.shape_cast %59 : vector<16xf32> to vector<16x1xf32>
    %61 = tpu.reciprocal %60 {approx = true} : vector<16x1xf32> -> vector<16x1xf32>
    %62 = vector.broadcast %61 : vector<16x1xf32> to vector<16x16xf32>
    %63 = arith.mulf %58, %62 : vector<16x16xf32>
    %cst_16 = arith.constant dense<0.000000e+00> : vector<16x8xf32>
    %64 = tpu.matmul %63, %51, %cst_16 {dimension_numbers = #tpu.dot_dimension_numbers<[1], [0], [0], [1], [0, 0, 1, 1], [], []>} : vector<16x16xf32>, vector<16x8xf32>, vector<16x8xf32> -> vector<16x8xf32>
    %65 = vector.extract_strided_slice %16 {offsets = [0, 24], sizes = [16, 8], strides = [1, 1]} : vector<16x96xf32> to vector<16x8xf32>
    %66 = vector.extract_strided_slice %16 {offsets = [0, 56], sizes = [16, 8], strides = [1, 1]} : vector<16x96xf32> to vector<16x8xf32>
    %67 = vector.extract_strided_slice %16 {offsets = [0, 88], sizes = [16, 8], strides = [1, 1]} : vector<16x96xf32> to vector<16x8xf32>
    %cst_17 = arith.constant dense<0.000000e+00> : vector<16x16xf32>
    %68 = tpu.matmul %65, %66, %cst_17 {dimension_numbers = #tpu.dot_dimension_numbers<[1], [1], [0], [0], [0, 0, 1, 0], [], []>} : vector<16x8xf32>, vector<16x8xf32>, vector<16x16xf32> -> vector<16x16xf32>
    %69 = arith.addf %68, %12 : vector<16x16xf32>
    %cst_18 = arith.constant dense<0xFF800000> : vector<16xf32>
    %70 = vector.multi_reduction <maximumf>, %69, %cst_18 [1] : vector<16x16xf32> to vector<16xf32>
    %71 = vector.shape_cast %70 : vector<16xf32> to vector<16x1xf32>
    %72 = vector.broadcast %71 : vector<16x1xf32> to vector<16x16xf32>
    %73 = arith.subf %69, %72 : vector<16x16xf32>
    %74 = math.exp %73 : vector<16x16xf32>
    %cst_19 = arith.constant dense<0.000000e+00> : vector<16xf32>
    %75 = vector.multi_reduction <add>, %74, %cst_19 [1] : vector<16x16xf32> to vector<16xf32>
    %76 = vector.shape_cast %75 : vector<16xf32> to vector<16x1xf32>
    %77 = tpu.reciprocal %76 {approx = true} : vector<16x1xf32> -> vector<16x1xf32>
    %78 = vector.broadcast %77 : vector<16x1xf32> to vector<16x16xf32>
    %79 = arith.mulf %74, %78 : vector<16x16xf32>
    %cst_20 = arith.constant dense<0.000000e+00> : vector<16x8xf32>
    %80 = tpu.matmul %79, %67, %cst_20 {dimension_numbers = #tpu.dot_dimension_numbers<[1], [0], [0], [1], [0, 0, 1, 1], [], []>} : vector<16x16xf32>, vector<16x8xf32>, vector<16x8xf32> -> vector<16x8xf32>
    %81 = tpu.concatenate %32, %48, %64, %80 in 1 : vector<16x8xf32>, vector<16x8xf32>, vector<16x8xf32>, vector<16x8xf32> -> vector<16x32xf32>
    %82 = vector.extract_strided_slice %2 {offsets = [0, 96], sizes = [32, 32], strides = [1, 1]} : vector<32x128xbf16> to vector<32x32xbf16>
    %83 = arith.truncf %81 : vector<16x32xf32> to vector<16x32xbf16>
    %cst_21 = arith.constant dense<0.000000e+00> : vector<16x32xf32>
    %84 = tpu.matmul %83, %82, %cst_21 {dimension_numbers = #tpu.dot_dimension_numbers<[1], [0], [0], [1], [0, 0, 1, 1], [], []>} : vector<16x32xbf16>, vector<32x32xbf16>, vector<16x32xf32> -> vector<16x32xf32>
    %85 = vector.broadcast %5 : vector<1x32xf32> to vector<16x32xf32>
    %86 = arith.addf %84, %85 : vector<16x32xf32>
    %87 = arith.addf %0, %86 : vector<16x32xf32>
    %cst_22 = arith.constant dense<0.000000e+00> : vector<16xf32>
    %88 = vector.multi_reduction <add>, %87, %cst_22 [1] : vector<16x32xf32> to vector<16xf32>
    %89 = vector.shape_cast %88 : vector<16xf32> to vector<16x1xf32>
    %cst_23 = arith.constant 3.200000e+01 : f32
    %90 = vector.broadcast %cst_23 : f32 to vector<16x1xf32>
    %91 = arith.divf %89, %90 : vector<16x1xf32>
    %92 = vector.broadcast %91 : vector<16x1xf32> to vector<16x32xf32>
    %93 = arith.subf %87, %92 : vector<16x32xf32>
    %94 = arith.mulf %93, %93 : vector<16x32xf32>
    %cst_24 = arith.constant dense<0.000000e+00> : vector<16xf32>
    %95 = vector.multi_reduction <add>, %94, %cst_24 [1] : vector<16x32xf32> to vector<16xf32>
    %96 = vector.shape_cast %95 : vector<16xf32> to vector<16x1xf32>
    %cst_25 = arith.constant 3.200000e+01 : f32
    %97 = vector.broadcast %cst_25 : f32 to vector<16x1xf32>
    %98 = arith.divf %96, %97 : vector<16x1xf32>
    %99 = vector.broadcast %91 : vector<16x1xf32> to vector<16x32xf32>
    %100 = arith.subf %87, %99 : vector<16x32xf32>
    %cst_26 = arith.constant 9.99999974E-6 : f32
    %101 = vector.broadcast %cst_26 : f32 to vector<16x1xf32>
    %102 = arith.addf %98, %101 : vector<16x1xf32>
    %103 = math.rsqrt %102 : vector<16x1xf32>
    %104 = vector.broadcast %103 : vector<16x1xf32> to vector<16x32xf32>
    %105 = arith.mulf %100, %104 : vector<16x32xf32>
    %106 = vector.broadcast %8 : vector<1x32xf32> to vector<16x32xf32>
    %107 = arith.mulf %105, %106 : vector<16x32xf32>
    %108 = vector.broadcast %9 : vector<1x32xf32> to vector<16x32xf32>
    %109 = arith.addf %107, %108 : vector<16x32xf32>
    %110 = arith.truncf %109 : vector<16x32xf32> to vector<16x32xbf16>
    %c0_27 = arith.constant 0 : index
    %c0_28 = arith.constant 0 : index
    %111 = vector.load %arg2[%c0_27, %c0_28] : memref<32x64xbf16, #tpu.memory_space<vmem>>, vector<32x64xbf16>
    %cst_29 = arith.constant dense<0.000000e+00> : vector<16x64xf32>
    %112 = tpu.matmul %110, %111, %cst_29 {dimension_numbers = #tpu.dot_dimension_numbers<[1], [0], [0], [1], [0, 0, 1, 1], [], []>} : vector<16x32xbf16>, vector<32x64xbf16>, vector<16x64xf32> -> vector<16x64xf32>
    %113 = vector.broadcast %6 : vector<1x64xf32> to vector<16x64xf32>
    %114 = arith.addf %112, %113 : vector<16x64xf32>
    %cst_30 = arith.constant 0.000000e+00 : f32
    %115 = vector.broadcast %cst_30 : f32 to vector<16x64xf32>
    %116 = arith.maximumf %114, %115 : vector<16x64xf32>
    %117 = arith.truncf %116 : vector<16x64xf32> to vector<16x64xbf16>
    %c0_31 = arith.constant 0 : index
    %c0_32 = arith.constant 0 : index
    %118 = vector.load %arg3[%c0_31, %c0_32] : memref<64x32xbf16, #tpu.memory_space<vmem>>, vector<64x32xbf16>
    %cst_33 = arith.constant dense<0.000000e+00> : vector<16x32xf32>
    %119 = tpu.matmul %117, %118, %cst_33 {dimension_numbers = #tpu.dot_dimension_numbers<[1], [0], [0], [1], [0, 0, 1, 1], [], []>} : vector<16x64xbf16>, vector<64x32xbf16>, vector<16x32xf32> -> vector<16x32xf32>
    %120 = vector.broadcast %7 : vector<1x32xf32> to vector<16x32xf32>
    %121 = arith.addf %119, %120 : vector<16x32xf32>
    %122 = arith.addf %109, %121 : vector<16x32xf32>
    %cst_34 = arith.constant dense<0.000000e+00> : vector<16xf32>
    %123 = vector.multi_reduction <add>, %122, %cst_34 [1] : vector<16x32xf32> to vector<16xf32>
    %124 = vector.shape_cast %123 : vector<16xf32> to vector<16x1xf32>
    %cst_35 = arith.constant 3.200000e+01 : f32
    %125 = vector.broadcast %cst_35 : f32 to vector<16x1xf32>
    %126 = arith.divf %124, %125 : vector<16x1xf32>
    %127 = vector.broadcast %126 : vector<16x1xf32> to vector<16x32xf32>
    %128 = arith.subf %122, %127 : vector<16x32xf32>
    %129 = arith.mulf %128, %128 : vector<16x32xf32>
    %cst_36 = arith.constant dense<0.000000e+00> : vector<16xf32>
    %130 = vector.multi_reduction <add>, %129, %cst_36 [1] : vector<16x32xf32> to vector<16xf32>
    %131 = vector.shape_cast %130 : vector<16xf32> to vector<16x1xf32>
    %cst_37 = arith.constant 3.200000e+01 : f32
    %132 = vector.broadcast %cst_37 : f32 to vector<16x1xf32>
    %133 = arith.divf %131, %132 : vector<16x1xf32>
    %134 = vector.broadcast %126 : vector<16x1xf32> to vector<16x32xf32>
    %135 = arith.subf %122, %134 : vector<16x32xf32>
    %cst_38 = arith.constant 9.99999974E-6 : f32
    %136 = vector.broadcast %cst_38 : f32 to vector<16x1xf32>
    %137 = arith.addf %133, %136 : vector<16x1xf32>
    %138 = math.rsqrt %137 : vector<16x1xf32>
    %139 = vector.broadcast %138 : vector<16x1xf32> to vector<16x32xf32>
    %140 = arith.mulf %135, %139 : vector<16x32xf32>
    %141 = vector.broadcast %10 : vector<1x32xf32> to vector<16x32xf32>
    %142 = arith.mulf %140, %141 : vector<16x32xf32>
    %143 = vector.broadcast %11 : vector<1x32xf32> to vector<16x32xf32>
    %144 = arith.addf %142, %143 : vector<16x32xf32>
    %c0_39 = arith.constant 0 : index
    %c0_40 = arith.constant 0 : index
    %145 = vector.load %arg5[%c0_39, %c0_40] : memref<16x32xf32, #tpu.memory_space<vmem>>, vector<16x32xf32>
    tpu.vector_store %arg5[%c0_39, %c0_40], %144 {strides = array<i32>} : memref<16x32xf32, #tpu.memory_space<vmem>>, vector<16x32xf32>,
    return
  }
}

</mosaic_0001>

<llo_original>
// kernel: encoder_layer.1
$region0: #{encoder_layer.1}
  #allocation0 [shape = 'u32[]', space=smem, size = 0x4, offset = 0x4, fixed_abs, tag = 'smem constant byte address 0x4 - core index']
  #allocation1 [shape = 'u32[144,128]{1,0:T(1,128)}', space=vmem, size = 0x12000, scoped, tag = 'internal scratch']
  %s0 = inlined_call_operand.vmem [shape: f32[16,32], index: 0, kind: input, shape index: {}]
  %s1 = inlined_call_operand.vmem [shape: bf16[32,128], index: 1, kind: input, shape index: {}]
  %s2 = inlined_call_operand.hbm [shape: bf16[32,64], index: 2, kind: input, shape index: {}]
  %s3 = inlined_call_operand.vmem [shape: bf16[64,32], index: 3, kind: input, shape index: {}]
  %s4 = inlined_call_operand.vmem [shape: f32[24,128], index: 4, kind: input, shape index: {}]
  %s5 = inlined_call_operand.hbm [shape: f32[16,32], index: 5, kind: output, shape index: {}]
  %s6 = sld [smem:[#allocation0]]
  $region34: #{encoder_layer.1} parent=0
    _
  %s8 = ssub.s32 1, %s6
  %s9 = scalar_select 0, %s8, %s6
  $region1: #{encoder_layer.1} parent=0
    #allocation2 [shape = 'u8[8192]{0}', space=vmem, size = 0x2000, scoped, tag = 'input window, operand 2, single buffered']
    #allocation3 [shape = 's32[1]{0}', space=sflag, size = 0x4, scoped, tag = 'scoped memory for encoder_layer.1']
    #allocation4 [shape = 's32[1]{0}', space=sflag, size = 0x4, scoped, tag = 'scoped memory for encoder_layer.1']
    #allocation5 [shape = 'u8[8192]{0}', space=vmem, size = 0x2000, scoped, tag = 'output window, operand 0, single buffered']
    %10 = vsyncpa [#allocation3], 0
    %11 = vsyncpa [#allocation4], 0
    // Predicated region
    $region2: #{encoder_layer.1} parent=1 // pred_check
      _
    $region3: #{encoder_layer.1} parent=1 // pred_check_branch
      %13 = sbr.rel (0) target = $region5
    $region4: #{encoder_layer.1} parent=1 // pred_region
      _
    $region5: #{encoder_layer.1} parent=1 // pred_fallthru
      _
    // Predicated region
    $region6: #{encoder_layer.1} parent=1 // pred_check
      _
    $region7: #{encoder_layer.1} parent=1 // pred_check_branch
      %15 = sbr.rel (0) target = $region9
    $region8: #{encoder_layer.1} parent=1 // pred_region
      _
    $region9: #{encoder_layer.1} parent=1 // pred_fallthru
      _
    // Predicated region
    $region10: #{encoder_layer.1} parent=1 // pred_check
      _
    $region11: #{encoder_layer.1} parent=1 // pred_check_branch
      %17 = sbr.rel (0) target = $region13
    $region12: #{encoder_layer.1} parent=1 // pred_region
      %s19 = ssub.s32 256, 256
      %20 = vsyncadd [#allocation3], %s19
      %s21 = sshll.u32 [#allocation2], 4
      %s22 = int_to_ptr.vmem [resolvable:$true] %s21
      %27 = dma.hbm_to_vmem [thread:$0]  %s2, 256, %s22, [#allocation3], 64, 64, 4
    $region13: #{encoder_layer.1} parent=1 // pred_fallthru
      _
    // Predicated region
    $region14: #{encoder_layer.1} parent=1 // pred_check
      _
    $region15: #{encoder_layer.1} parent=1 // pred_check_branch
      %29 = sbr.rel (0) target = $region17
    $region16: #{encoder_layer.1} parent=1 // pred_region
      _
    $region17: #{encoder_layer.1} parent=1 // pred_fallthru
      _
    // Predicated region
    $region18: #{encoder_layer.1} parent=1 // pred_check
      _
    $region19: #{encoder_layer.1} parent=1 // pred_check_branch
      %31 = sbr.rel (0) target = $region21
    $region20: #{encoder_layer.1} parent=1 // pred_region
      _
    $region21: #{encoder_layer.1} parent=1 // pred_fallthru
      _
    // Predicated region
    $region22: #{encoder_layer.1} parent=1 // pred_check
      _
    $region23: #{encoder_layer.1} parent=1 // pred_check_branch
      %33 = sbr.rel (0) target = $region25
    $region24: #{encoder_layer.1} parent=1 // pred_region
      %34 = dma.done [#allocation3], 256
    $region25: #{encoder_layer.1} parent=1 // pred_fallthru
      _
    %v36 = vld [vmem:[%s0] sm:$0xff]
    %v37 = vld [vmem:[%s0 + $0x8] sm:$0xff]
    %v38 = vpack.c.bf16 %v37, %v36
    %v39 = vld [vmem:[%s1] sm:$0xf]
    %v40 = vld [vmem:[%s1 + $0x4] sm:$0xf]
    %v41 = vld [vmem:[%s1 + $0x8] sm:$0xf]
    %v42 = vld [vmem:[%s1 + $0xc] sm:$0xf]
    %v43 = vld [vmem:[%s4] sm:$0xff]
    %v44 = vld [vmem:[%s4 + $0x8] sm:$0xff]
    %v45 = vld [vmem:[%s4 + $0x10] sm:$0xff]
    %v50 = vunpack.c.l.b16 %v39
    %v51 = vunpack.c.l.b16 %v40
    %v52 = vunpack.c.l.b16 %v41
    %v53 = vunpack.c.l.b16 %v42
    %v54 = vpack.c.b16 %v51, %v50
    %v55 = vpack.c.b16 %v53, %v52
    %vm58 = vcmask 261120
    %v60 = vsel %vm58, %v38, 0
    %62 = vmatprep.subr.bf16.mxu0 0
    %63 = vmatpush1.bf16.msra.mxu0 0
    %64 = vmatprep.subr.bf16.mxu0 0
    %65 = vmatpush1.bf16.msra.mxu0 0
    %66 = vmatprep.subr.bf16.mxu0 0
    %67 = vmatpush1.bf16.msra.mxu0 0
    %68 = vmatprep.subr.bf16.mxu0 0
    %69 = vmatpush1.bf16.msra.mxu0 0
    %70 = vmatprep.subr.bf16.mxu0 0
    %71 = vmatpush1.bf16.msra.mxu0 0
    %72 = vmatprep.subr.bf16.mxu0 0
    %73 = vmatpush1.bf16.msra.mxu0 0
    %74 = vmatprep.subr.bf16.mxu0 0
    %75 = vmatpush1.bf16.msra.mxu0 %v55
    %76 = vmatprep.subr.bf16.mxu0 0
    %77 = vmatpush1.bf16.msra.mxu0 %v54
    %78 = vmatprep.subr.bf16.mxu0 0
    %79 = vmatpush2.bf16.msra.mxu0 0
    %80 = vmatprep.subr.bf16.mxu0 0
    %81 = vmatpush2.bf16.msra.mxu0 0
    %82 = vmatprep.subr.bf16.mxu0 0
    %83 = vmatpush2.bf16.msra.mxu0 0
    %84 = vmatprep.subr.bf16.mxu0 0
    %85 = vmatpush2.bf16.msra.mxu0 0
    %86 = vmatprep.subr.bf16.mxu0 0
    %87 = vmatpush2.bf16.msra.mxu0 0
    %88 = vmatprep.subr.bf16.mxu0 0
    %89 = vmatpush2.bf16.msra.mxu0 0
    %90 = vmatprep.subr.bf16.mxu0 0
    %91 = vmatpush2.bf16.msra.mxu0 0
    %92 = vmatprep.subr.bf16.mxu0 0
    %93 = vmatpush2.bf16.msra.mxu0 0
    %94 = vmatprep.mubr.bf16.mxu0 0
    %95 = vmatmul.mubr.bf16.gmra.mxu0 %v60
    %v96 = vpop.f32.mrf.mxu0
    %v97 = vadd.f32 0.0, %v96
    %v98 = vpop.f32.mrf.mxu0
    %v99 = vpop.f32.mrf.mxu0
    %v100 = vadd.f32 0.0, %v99
    %v101 = vpop.f32.mrf.mxu0
    %102 = vdwg.mxu0
    %v103 = vlaneseq
    %v104 = vshrl.u32 %v103, 7
    %v105 = vsub.s32 0, %v104
    %v106 = vrot.slane %v43, %v105
    %v107 = vadd.f32 %v97, %v106
    %v108 = vadd.f32 %v100, %v106
    %111 = vrot.lane.b32.xlu0 %v107, 96
    %v112 = vpop.permute.xlu0 %111
    %113 = vrot.lane.b32.xlu0 %v108, 96
    %v114 = vpop.permute.xlu0 %113
    %vm115 = vcmask 64512
    %v116 = vsel %vm115, %v107, 0
    %v118 = vsel %vm115, %v108, 0
    %v120 = vsel %vm115, %v112, 0
    %v122 = vsel %vm115, %v114, 0
    %124 = vmatprep.subr.mxu0 0.0
    %125 = vmatpush1.xpose.msra.mxu0 0.0
    %126 = vmatprep.subr.mxu0 0.0
    %127 = vmatpush1.xpose.msra.mxu0 0.0
    %128 = vmatprep.subr.mxu0 0.0
    %129 = vmatpush1.xpose.msra.mxu0 0.0
    %130 = vmatprep.subr.mxu0 0.0
    %131 = vmatpush1.xpose.msra.mxu0 0.0
    %132 = vmatprep.subr.mxu0 0.0
    %133 = vmatpush1.xpose.msra.mxu0 0.0
    %134 = vmatprep.subr.mxu0 0.0
    %135 = vmatpush1.xpose.msra.mxu0 0.0
    %136 = vmatprep.subr.mxu0 0.0
    %137 = vmatpush1.xpose.msra.mxu0 0.0
    %138 = vmatprep.subr.mxu0 0.0
    %139 = vmatpush1.xpose.msra.mxu0 0.0
    %140 = vmatprep.subr.mxu0 0.0
    %141 = vmatpush1.xpose.msra.mxu0 0.0
    %142 = vmatprep.subr.mxu0 0.0
    %143 = vmatpush1.xpose.msra.mxu0 0.0
    %144 = vmatprep.subr.mxu0 0.0
    %145 = vmatpush1.xpose.msra.mxu0 0.0
    %146 = vmatprep.subr.mxu0 0.0
    %147 = vmatpush1.xpose.msra.mxu0 0.0
    %148 = vmatprep.subr.mxu0 0.0
    %149 = vmatpush1.xpose.msra.mxu0 0.0
    %150 = vmatprep.subr.mxu0 0.0
    %151 = vmatpush1.xpose.msra.mxu0 0.0
    %152 = vmatprep.subr.mxu0 0.0
    %153 = vmatpush1.xpose.msra.mxu0 %v122
    %154 = vmatprep.subr.mxu0 0.0
    %155 = vmatpush1.xpose.msra.mxu0 %v120
    %156 = vmatprep.subr.mxu0 0.0
    %157 = vmatpush2.xpose.msra.mxu0 0.0
    %158 = vmatprep.subr.mxu0 0.0
    %159 = vmatpush2.xpose.msra.mxu0 0.0
    %160 = vmatprep.subr.mxu0 0.0
    %161 = vmatpush2.xpose.msra.mxu0 0.0
    %162 = vmatprep.subr.mxu0 0.0
    %163 = vmatpush2.xpose.msra.mxu0 0.0
    %164 = vmatprep.subr.mxu0 0.0
    %165 = vmatpush2.xpose.msra.mxu0 0.0
    %166 = vmatprep.subr.mxu0 0.0
    %167 = vmatpush2.xpose.msra.mxu0 0.0
    %168 = vmatprep.subr.mxu0 0.0
    %169 = vmatpush2.xpose.msra.mxu0 0.0
    %170 = vmatprep.subr.mxu0 0.0
    %171 = vmatpush2.xpose.msra.mxu0 0.0
    %172 = vmatprep.subr.mxu0 0.0
    %173 = vmatpush2.xpose.msra.mxu0 0.0
    %174 = vmatprep.subr.mxu0 0.0
    %175 = vmatpush2.xpose.msra.mxu0 0.0
    %176 = vmatprep.subr.mxu0 0.0
    %177 = vmatpush2.xpose.msra.mxu0 0.0
    %178 = vmatprep.subr.mxu0 0.0
    %179 = vmatpush2.xpose.msra.mxu0 0.0
    %180 = vmatprep.subr.mxu0 0.0
    %181 = vmatpush2.xpose.msra.mxu0 0.0
    %182 = vmatprep.subr.mxu0 0.0
    %183 = vmatpush2.xpose.msra.mxu0 0.0
    %184 = vmatprep.subr.mxu0 0.0
    %185 = vmatpush2.xpose.msra.mxu0 0.0
    %186 = vmatprep.subr.mxu0 0.0
    %187 = vmatpush2.xpose.msra.mxu0 0.0
    %188 = vmatprep.mubr.f32.mxu0 0.0
    %189 = vmatmul.mubr.f32.gmra.mxu0 %v116
    %v190 = vpop.f32.mrf.mxu0
    %v191 = vadd.f32 %v44, %v190
    %v192 = vpop.f32.mrf.mxu0
    %193 = vmatprep.mubr.f32.mxu0 0.0
    %194 = vmatmul.mubr.f32.gmra.mxu0 %v118
    %v195 = vpop.f32.mrf.mxu0
    %v196 = vadd.f32 %v45, %v195
    %v197 = vpop.f32.mrf.mxu0
    %198 = vdwg.mxu0
    %vm199 = vcmask 130048
    %v200 = vsel %vm199, %v191, -inf
    %201 = vmax.xlane.f32.xlu0 %v200
    %v202 = vpop.xlane.xlu0 %201
    %v203 = vsel %vm199, %v196, -inf
    %204 = vmax.xlane.f32.xlu0 %v203
    %v205 = vpop.xlane.xlu0 %204
    %v206 = vsub.f32 %v191, %v202
    %v207 = vsub.f32 %v196, %v205
    %v208 = vmul.f32 %v206, 1.442695
    %v209 = vpow.pop %v208
    %v210 = vmul.f32 %v207, 1.442695
    %v211 = vpow.pop %v210
    %v212 = vsel %vm199, %v209, 0.0
    %213 = vadd.xlane.f32.xlu0 %v212
    %v214 = vpop.xlane.xlu0 %213
    %v215 = vsel %vm199, %v211, 0.0
    %216 = vadd.xlane.f32.xlu0 %v215
    %v217 = vpop.xlane.xlu0 %216
    %v218 = vrcp.pop %v214
    %v219 = vrcp.pop %v217
    %v220 = vmul.f32 %v209, %v218
    %v221 = vmul.f32 %v211, %v219
    %222 = vrot.lane.b32.xlu0 %v107, 64
    %v223 = vpop.permute.xlu0 %222
    %224 = vrot.lane.b32.xlu0 %v108, 64
    %v225 = vpop.permute.xlu0 %224
    %v229 = vsel %vm199, %v220, 0
    %v232 = vsel %vm199, %v221, 0
    %234 = vmatprep.subr.mxu0 0.0
    %235 = vmatpush1.msra.mxu0 0.0
    %236 = vmatprep.subr.mxu0 0.0
    %237 = vmatpush1.msra.mxu0 0.0
    %238 = vmatprep.subr.mxu0 0.0
    %239 = vmatpush1.msra.mxu0 0.0
    %240 = vmatprep.subr.mxu0 0.0
    %241 = vmatpush1.msra.mxu0 0.0
    %242 = vmatprep.subr.mxu0 0.0
    %243 = vmatpush1.msra.mxu0 0.0
    %244 = vmatprep.subr.mxu0 0.0
    %245 = vmatpush1.msra.mxu0 0.0
    %246 = vmatprep.subr.mxu0 0.0
    %247 = vmatpush1.msra.mxu0 0.0
    %248 = vmatprep.subr.mxu0 0.0
    %249 = vmatpush1.msra.mxu0 0.0
    %250 = vmatprep.subr.mxu0 0.0
    %251 = vmatpush1.msra.mxu0 0.0
    %252 = vmatprep.subr.mxu0 0.0
    %253 = vmatpush1.msra.mxu0 0.0
    %254 = vmatprep.subr.mxu0 0.0
    %255 = vmatpush1.msra.mxu0 0.0
    %256 = vmatprep.subr.mxu0 0.0
    %257 = vmatpush1.msra.mxu0 0.0
    %258 = vmatprep.subr.mxu0 0.0
    %259 = vmatpush1.msra.mxu0 0.0
    %260 = vmatprep.subr.mxu0 0.0
    %261 = vmatpush1.msra.mxu0 0.0
    %262 = vmatprep.subr.mxu0 0.0
    %263 = vmatpush1.msra.mxu0 %v225
    %264 = vmatprep.subr.mxu0 0.0
    %265 = vmatpush1.msra.mxu0 %v223
    %266 = vmatprep.subr.mxu0 0.0
    %267 = vmatpush2.msra.mxu0 0.0
    %268 = vmatprep.subr.mxu0 0.0
    %269 = vmatpush2.msra.mxu0 0.0
    %270 = vmatprep.subr.mxu0 0.0
    %271 = vmatpush2.msra.mxu0 0.0
    %272 = vmatprep.subr.mxu0 0.0
    %273 = vmatpush2.msra.mxu0 0.0
    %274 = vmatprep.subr.mxu0 0.0
    %275 = vmatpush2.msra.mxu0 0.0
    %276 = vmatprep.subr.mxu0 0.0
    %277 = vmatpush2.msra.mxu0 0.0
    %278 = vmatprep.subr.mxu0 0.0
    %279 = vmatpush2.msra.mxu0 0.0
    %280 = vmatprep.subr.mxu0 0.0
    %281 = vmatpush2.msra.mxu0 0.0
    %282 = vmatprep.subr.mxu0 0.0
    %283 = vmatpush2.msra.mxu0 0.0
    %284 = vmatprep.subr.mxu0 0.0
    %285 = vmatpush2.msra.mxu0 0.0
    %286 = vmatprep.subr.mxu0 0.0
    %287 = vmatpush2.msra.mxu0 0.0
    %288 = vmatprep.subr.mxu0 0.0
    %289 = vmatpush2.msra.mxu0 0.0
    %290 = vmatprep.subr.mxu0 0.0
    %291 = vmatpush2.msra.mxu0 0.0
    %292 = vmatprep.subr.mxu0 0.0
    %293 = vmatpush2.msra.mxu0 0.0
    %294 = vmatprep.subr.mxu0 0.0
    %295 = vmatpush2.msra.mxu0 0.0
    %296 = vmatprep.subr.mxu0 0.0
    %297 = vmatpush2.msra.mxu0 0.0
    %298 = vmatprep.mubr.f32.mxu0 0.0
    %299 = vmatmul.mubr.f32.gmra.mxu0 %v229
    %v300 = vpop.f32.mrf.mxu0
    %v301 = vadd.f32 0.0, %v300
    %v302 = vpop.f32.mrf.mxu0
    %303 = vmatprep.mubr.f32.mxu0 0.0
    %304 = vmatmul.mubr.f32.gmra.mxu0 %v232
    %v305 = vpop.f32.mrf.mxu0
    %v306 = vadd.f32 0.0, %v305
    %v307 = vpop.f32.mrf.mxu0
    %308 = vdwg.mxu0
    %309 = vrot.lane.b32.xlu0 %v107, 120
    %v310 = vpop.permute.xlu0 %309
    %311 = vrot.lane.b32.xlu0 %v108, 120
    %v312 = vpop.permute.xlu0 %311
    %313 = vrot.lane.b32.xlu0 %v107, 88
    %v314 = vpop.permute.xlu0 %313
    %315 = vrot.lane.b32.xlu0 %v108, 88
    %v316 = vpop.permute.xlu0 %315
    %v317 = vsel %vm115, %v310, 0
    %v319 = vsel %vm115, %v312, 0
    %v321 = vsel %vm115, %v314, 0
    %v323 = vsel %vm115, %v316, 0
    %325 = vmatprep.subr.mxu0 0.0
    %326 = vmatpush1.xpose.msra.mxu0 0.0
    %327 = vmatprep.subr.mxu0 0.0
    %328 = vmatpush1.xpose.msra.mxu0 0.0
    %329 = vmatprep.subr.mxu0 0.0
    %330 = vmatpush1.xpose.msra.mxu0 0.0
    %331 = vmatprep.subr.mxu0 0.0
    %332 = vmatpush1.xpose.msra.mxu0 0.0
    %333 = vmatprep.subr.mxu0 0.0
    %334 = vmatpush1.xpose.msra.mxu0 0.0
    %335 = vmatprep.subr.mxu0 0.0
    %336 = vmatpush1.xpose.msra.mxu0 0.0
    %337 = vmatprep.subr.mxu0 0.0
    %338 = vmatpush1.xpose.msra.mxu0 0.0
    %339 = vmatprep.subr.mxu0 0.0
    %340 = vmatpush1.xpose.msra.mxu0 0.0
    %341 = vmatprep.subr.mxu0 0.0
    %342 = vmatpush1.xpose.msra.mxu0 0.0
    %343 = vmatprep.subr.mxu0 0.0
    %344 = vmatpush1.xpose.msra.mxu0 0.0
    %345 = vmatprep.subr.mxu0 0.0
    %346 = vmatpush1.xpose.msra.mxu0 0.0
    %347 = vmatprep.subr.mxu0 0.0
    %348 = vmatpush1.xpose.msra.mxu0 0.0
    %349 = vmatprep.subr.mxu0 0.0
    %350 = vmatpush1.xpose.msra.mxu0 0.0
    %351 = vmatprep.subr.mxu0 0.0
    %352 = vmatpush1.xpose.msra.mxu0 0.0
    %353 = vmatprep.subr.mxu0 0.0
    %354 = vmatpush1.xpose.msra.mxu0 %v323
    %355 = vmatprep.subr.mxu0 0.0
    %356 = vmatpush1.xpose.msra.mxu0 %v321
    %357 = vmatprep.subr.mxu0 0.0
    %358 = vmatpush2.xpose.msra.mxu0 0.0
    %359 = vmatprep.subr.mxu0 0.0
    %360 = vmatpush2.xpose.msra.mxu0 0.0
    %361 = vmatprep.subr.mxu0 0.0
    %362 = vmatpush2.xpose.msra.mxu0 0.0
    %363 = vmatprep.subr.mxu0 0.0
    %364 = vmatpush2.xpose.msra.mxu0 0.0
    %365 = vmatprep.subr.mxu0 0.0
    %366 = vmatpush2.xpose.msra.mxu0 0.0
    %367 = vmatprep.subr.mxu0 0.0
    %368 = vmatpush2.xpose.msra.mxu0 0.0
    %369 = vmatprep.subr.mxu0 0.0
    %370 = vmatpush2.xpose.msra.mxu0 0.0
    %371 = vmatprep.subr.mxu0 0.0
    %372 = vmatpush2.xpose.msra.mxu0 0.0
    %373 = vmatprep.subr.mxu0 0.0
    %374 = vmatpush2.xpose.msra.mxu0 0.0
    %375 = vmatprep.subr.mxu0 0.0
    %376 = vmatpush2.xpose.msra.mxu0 0.0
    %377 = vmatprep.subr.mxu0 0.0
    %378 = vmatpush2.xpose.msra.mxu0 0.0
    %379 = vmatprep.subr.mxu0 0.0
    %380 = vmatpush2.xpose.msra.mxu0 0.0
    %381 = vmatprep.subr.mxu0 0.0
    %382 = vmatpush2.xpose.msra.mxu0 0.0
    %383 = vmatprep.subr.mxu0 0.0
    %384 = vmatpush2.xpose.msra.mxu0 0.0
    %385 = vmatprep.subr.mxu0 0.0
    %386 = vmatpush2.xpose.msra.mxu0 0.0
    %387 = vmatprep.subr.mxu0 0.0
    %388 = vmatpush2.xpose.msra.mxu0 0.0
    %389 = vmatprep.mubr.f32.mxu0 0.0
    %390 = vmatmul.mubr.f32.gmra.mxu0 %v317
    %v391 = vpop.f32.mrf.mxu0
    %v392 = vadd.f32 %v44, %v391
    %v393 = vpop.f32.mrf.mxu0
    %394 = vmatprep.mubr.f32.mxu0 0.0
    %395 = vmatmul.mubr.f32.gmra.mxu0 %v319
    %v396 = vpop.f32.mrf.mxu0
    %v397 = vadd.f32 %v45, %v396
    %v398 = vpop.f32.mrf.mxu0
    %399 = vdwg.mxu0
    %v400 = vsel %vm199, %v392, -inf
    %401 = vmax.xlane.f32.xlu0 %v400
    %v402 = vpop.xlane.xlu0 %401
    %v403 = vsel %vm199, %v397, -inf
    %404 = vmax.xlane.f32.xlu0 %v403
    %v405 = vpop.xlane.xlu0 %404
    %v406 = vsub.f32 %v392, %v402
    %v407 = vsub.f32 %v397, %v405
    %v408 = vmul.f32 %v406, 1.442695
    %v409 = vpow.pop %v408
    %v410 = vmul.f32 %v407, 1.442695
    %v411 = vpow.pop %v410
    %v412 = vsel %vm199, %v409, 0.0
    %413 = vadd.xlane.f32.xlu0 %v412
    %v414 = vpop.xlane.xlu0 %413
    %v415 = vsel %vm199, %v411, 0.0
    %416 = vadd.xlane.f32.xlu0 %v415
    %v417 = vpop.xlane.xlu0 %416
    %v418 = vrcp.pop %v414
    %v419 = vrcp.pop %v417
    %v420 = vmul.f32 %v409, %v418
    %v421 = vmul.f32 %v411, %v419
    %422 = vrot.lane.b32.xlu0 %v107, 56
    %v423 = vpop.permute.xlu0 %422
    %424 = vrot.lane.b32.xlu0 %v108, 56
    %v425 = vpop.permute.xlu0 %424
    %v429 = vsel %vm199, %v420, 0
    %v432 = vsel %vm199, %v421, 0
    %434 = vmatprep.subr.mxu0 0.0
    %435 = vmatpush1.msra.mxu0 0.0
    %436 = vmatprep.subr.mxu0 0.0
    %437 = vmatpush1.msra.mxu0 0.0
    %438 = vmatprep.subr.mxu0 0.0
    %439 = vmatpush1.msra.mxu0 0.0
    %440 = vmatprep.subr.mxu0 0.0
    %441 = vmatpush1.msra.mxu0 0.0
    %442 = vmatprep.subr.mxu0 0.0
    %443 = vmatpush1.msra.mxu0 0.0
    %444 = vmatprep.subr.mxu0 0.0
    %445 = vmatpush1.msra.mxu0 0.0
    %446 = vmatprep.subr.mxu0 0.0
    %447 = vmatpush1.msra.mxu0 0.0
    %448 = vmatprep.subr.mxu0 0.0
    %449 = vmatpush1.msra.mxu0 0.0
    %450 = vmatprep.subr.mxu0 0.0
    %451 = vmatpush1.msra.mxu0 0.0
    %452 = vmatprep.subr.mxu0 0.0
    %453 = vmatpush1.msra.mxu0 0.0
    %454 = vmatprep.subr.mxu0 0.0
    %455 = vmatpush1.msra.mxu0 0.0
    %456 = vmatprep.subr.mxu0 0.0
    %457 = vmatpush1.msra.mxu0 0.0
    %458 = vmatprep.subr.mxu0 0.0
    %459 = vmatpush1.msra.mxu0 0.0
    %460 = vmatprep.subr.mxu0 0.0
    %461 = vmatpush1.msra.mxu0 0.0
    %462 = vmatprep.subr.mxu0 0.0
    %463 = vmatpush1.msra.mxu0 %v425
    %464 = vmatprep.subr.mxu0 0.0
    %465 = vmatpush1.msra.mxu0 %v423
    %466 = vmatprep.subr.mxu0 0.0
    %467 = vmatpush2.msra.mxu0 0.0
    %468 = vmatprep.subr.mxu0 0.0
    %469 = vmatpush2.msra.mxu0 0.0
    %470 = vmatprep.subr.mxu0 0.0
    %471 = vmatpush2.msra.mxu0 0.0
    %472 = vmatprep.subr.mxu0 0.0
    %473 = vmatpush2.msra.mxu0 0.0
    %474 = vmatprep.subr.mxu0 0.0
    %475 = vmatpush2.msra.mxu0 0.0
    %476 = vmatprep.subr.mxu0 0.0
    %477 = vmatpush2.msra.mxu0 0.0
    %478 = vmatprep.subr.mxu0 0.0
    %479 = vmatpush2.msra.mxu0 0.0
    %480 = vmatprep.subr.mxu0 0.0
    %481 = vmatpush2.msra.mxu0 0.0
    %482 = vmatprep.subr.mxu0 0.0
    %483 = vmatpush2.msra.mxu0 0.0
    %484 = vmatprep.subr.mxu0 0.0
    %485 = vmatpush2.msra.mxu0 0.0
    %486 = vmatprep.subr.mxu0 0.0
    %487 = vmatpush2.msra.mxu0 0.0
    %488 = vmatprep.subr.mxu0 0.0
    %489 = vmatpush2.msra.mxu0 0.0
    %490 = vmatprep.subr.mxu0 0.0
    %491 = vmatpush2.msra.mxu0 0.0
    %492 = vmatprep.subr.mxu0 0.0
    %493 = vmatpush2.msra.mxu0 0.0
    %494 = vmatprep.subr.mxu0 0.0
    %495 = vmatpush2.msra.mxu0 0.0
    %496 = vmatprep.subr.mxu0 0.0
    %497 = vmatpush2.msra.mxu0 0.0
    %498 = vmatprep.mubr.f32.mxu0 0.0
    %499 = vmatmul.mubr.f32.gmra.mxu0 %v429
    %v500 = vpop.f32.mrf.mxu0
    %v501 = vadd.f32 0.0, %v500
    %v502 = vpop.f32.mrf.mxu0
    %503 = vmatprep.mubr.f32.mxu0 0.0
    %504 = vmatmul.mubr.f32.gmra.mxu0 %v432
    %v505 = vpop.f32.mrf.mxu0
    %v506 = vadd.f32 0.0, %v505
    %v507 = vpop.f32.mrf.mxu0
    %508 = vdwg.mxu0
    %509 = vrot.lane.b32.xlu0 %v107, 112
    %v510 = vpop.permute.xlu0 %509
    %511 = vrot.lane.b32.xlu0 %v108, 112
    %v512 = vpop.permute.xlu0 %511
    %513 = vrot.lane.b32.xlu0 %v107, 80
    %v514 = vpop.permute.xlu0 %513
    %515 = vrot.lane.b32.xlu0 %v108, 80
    %v516 = vpop.permute.xlu0 %515
    %v517 = vsel %vm115, %v510, 0
    %v519 = vsel %vm115, %v512, 0
    %v521 = vsel %vm115, %v514, 0
    %v523 = vsel %vm115, %v516, 0
    %525 = vmatprep.subr.mxu0 0.0
    %526 = vmatpush1.xpose.msra.mxu0 0.0
    %527 = vmatprep.subr.mxu0 0.0
    %528 = vmatpush1.xpose.msra.mxu0 0.0
    %529 = vmatprep.subr.mxu0 0.0
    %530 = vmatpush1.xpose.msra.mxu0 0.0
    %531 = vmatprep.subr.mxu0 0.0
    %532 = vmatpush1.xpose.msra.mxu0 0.0
    %533 = vmatprep.subr.mxu0 0.0
    %534 = vmatpush1.xpose.msra.mxu0 0.0
    %535 = vmatprep.subr.mxu0 0.0
    %536 = vmatpush1.xpose.msra.mxu0 0.0
    %537 = vmatprep.subr.mxu0 0.0
    %538 = vmatpush1.xpose.msra.mxu0 0.0
    %539 = vmatprep.subr.mxu0 0.0
    %540 = vmatpush1.xpose.msra.mxu0 0.0
    %541 = vmatprep.subr.mxu0 0.0
    %542 = vmatpush1.xpose.msra.mxu0 0.0
    %543 = vmatprep.subr.mxu0 0.0
    %544 = vmatpush1.xpose.msra.mxu0 0.0
    %545 = vmatprep.subr.mxu0 0.0
    %546 = vmatpush1.xpose.msra.mxu0 0.0
    %547 = vmatprep.subr.mxu0 0.0
    %548 = vmatpush1.xpose.msra.mxu0 0.0
    %549 = vmatprep.subr.mxu0 0.0
    %550 = vmatpush1.xpose.msra.mxu0 0.0
    %551 = vmatprep.subr.mxu0 0.0
    %552 = vmatpush1.xpose.msra.mxu0 0.0
    %553 = vmatprep.subr.mxu0 0.0
    %554 = vmatpush1.xpose.msra.mxu0 %v523
    %555 = vmatprep.subr.mxu0 0.0
    %556 = vmatpush1.xpose.msra.mxu0 %v521
    %557 = vmatprep.subr.mxu0 0.0
    %558 = vmatpush2.xpose.msra.mxu0 0.0
    %559 = vmatprep.subr.mxu0 0.0
    %560 = vmatpush2.xpose.msra.mxu0 0.0
    %561 = vmatprep.subr.mxu0 0.0
    %562 = vmatpush2.xpose.msra.mxu0 0.0
    %563 = vmatprep.subr.mxu0 0.0
    %564 = vmatpush2.xpose.msra.mxu0 0.0
    %565 = vmatprep.subr.mxu0 0.0
    %566 = vmatpush2.xpose.msra.mxu0 0.0
    %567 = vmatprep.subr.mxu0 0.0
    %568 = vmatpush2.xpose.msra.mxu0 0.0
    %569 = vmatprep.subr.mxu0 0.0
    %570 = vmatpush2.xpose.msra.mxu0 0.0
    %571 = vmatprep.subr.mxu0 0.0
    %572 = vmatpush2.xpose.msra.mxu0 0.0
    %573 = vmatprep.subr.mxu0 0.0
    %574 = vmatpush2.xpose.msra.mxu0 0.0
    %575 = vmatprep.subr.mxu0 0.0
    %576 = vmatpush2.xpose.msra.mxu0 0.0
    %577 = vmatprep.subr.mxu0 0.0
    %578 = vmatpush2.xpose.msra.mxu0 0.0
    %579 = vmatprep.subr.mxu0 0.0
    %580 = vmatpush2.xpose.msra.mxu0 0.0
    %581 = vmatprep.subr.mxu0 0.0
    %582 = vmatpush2.xpose.msra.mxu0 0.0
    %583 = vmatprep.subr.mxu0 0.0
    %584 = vmatpush2.xpose.msra.mxu0 0.0
    %585 = vmatprep.subr.mxu0 0.0
    %586 = vmatpush2.xpose.msra.mxu0 0.0
    %587 = vmatprep.subr.mxu0 0.0
    %588 = vmatpush2.xpose.msra.mxu0 0.0
    %589 = vmatprep.mubr.f32.mxu0 0.0
    %590 = vmatmul.mubr.f32.gmra.mxu0 %v517
    %v591 = vpop.f32.mrf.mxu0
    %v592 = vadd.f32 %v44, %v591
    %v593 = vpop.f32.mrf.mxu0
    %594 = vmatprep.mubr.f32.mxu0 0.0
    %595 = vmatmul.mubr.f32.gmra.mxu0 %v519
    %v596 = vpop.f32.mrf.mxu0
    %v597 = vadd.f32 %v45, %v596
    %v598 = vpop.f32.mrf.mxu0
    %599 = vdwg.mxu0
    %v600 = vsel %vm199, %v592, -inf
    %601 = vmax.xlane.f32.xlu0 %v600
    %v602 = vpop.xlane.xlu0 %601
    %v603 = vsel %vm199, %v597, -inf
    %604 = vmax.xlane.f32.xlu0 %v603
    %v605 = vpop.xlane.xlu0 %604
    %v606 = vsub.f32 %v592, %v602
    %v607 = vsub.f32 %v597, %v605
    %v608 = vmul.f32 %v606, 1.442695
    %v609 = vpow.pop %v608
    %v610 = vmul.f32 %v607, 1.442695
    %v611 = vpow.pop %v610
    %v612 = vsel %vm199, %v609, 0.0
    %613 = vadd.xlane.f32.xlu0 %v612
    %v614 = vpop.xlane.xlu0 %613
    %v615 = vsel %vm199, %v611, 0.0
    %616 = vadd.xlane.f32.xlu0 %v615
    %v617 = vpop.xlane.xlu0 %616
    %v618 = vrcp.pop %v614
    %v619 = vrcp.pop %v617
    %v620 = vmul.f32 %v609, %v618
    %v621 = vmul.f32 %v611, %v619
    %622 = vrot.lane.b32.xlu0 %v107, 48
    %v623 = vpop.permute.xlu0 %622
    %624 = vrot.lane.b32.xlu0 %v108, 48
    %v625 = vpop.permute.xlu0 %624
    %v629 = vsel %vm199, %v620, 0
    %v632 = vsel %vm199, %v621, 0
    %634 = vmatprep.subr.mxu0 0.0
    %635 = vmatpush1.msra.mxu0 0.0
    %636 = vmatprep.subr.mxu0 0.0
    %637 = vmatpush1.msra.mxu0 0.0
    %638 = vmatprep.subr.mxu0 0.0
    %639 = vmatpush1.msra.mxu0 0.0
    %640 = vmatprep.subr.mxu0 0.0
    %641 = vmatpush1.msra.mxu0 0.0
    %642 = vmatprep.subr.mxu0 0.0
    %643 = vmatpush1.msra.mxu0 0.0
    %644 = vmatprep.subr.mxu0 0.0
    %645 = vmatpush1.msra.mxu0 0.0
    %646 = vmatprep.subr.mxu0 0.0
    %647 = vmatpush1.msra.mxu0 0.0
    %648 = vmatprep.subr.mxu0 0.0
    %649 = vmatpush1.msra.mxu0 0.0
    %650 = vmatprep.subr.mxu0 0.0
    %651 = vmatpush1.msra.mxu0 0.0
    %652 = vmatprep.subr.mxu0 0.0
    %653 = vmatpush1.msra.mxu0 0.0
    %654 = vmatprep.subr.mxu0 0.0
    %655 = vmatpush1.msra.mxu0 0.0
    %656 = vmatprep.subr.mxu0 0.0
    %657 = vmatpush1.msra.mxu0 0.0
    %658 = vmatprep.subr.mxu0 0.0
    %659 = vmatpush1.msra.mxu0 0.0
    %660 = vmatprep.subr.mxu0 0.0
    %661 = vmatpush1.msra.mxu0 0.0
    %662 = vmatprep.subr.mxu0 0.0
    %663 = vmatpush1.msra.mxu0 %v625
    %664 = vmatprep.subr.mxu0 0.0
    %665 = vmatpush1.msra.mxu0 %v623
    %666 = vmatprep.subr.mxu0 0.0
    %667 = vmatpush2.msra.mxu0 0.0
    %668 = vmatprep.subr.mxu0 0.0
    %669 = vmatpush2.msra.mxu0 0.0
    %670 = vmatprep.subr.mxu0 0.0
    %671 = vmatpush2.msra.mxu0 0.0
    %672 = vmatprep.subr.mxu0 0.0
    %673 = vmatpush2.msra.mxu0 0.0
    %674 = vmatprep.subr.mxu0 0.0
    %675 = vmatpush2.msra.mxu0 0.0
    %676 = vmatprep.subr.mxu0 0.0
    %677 = vmatpush2.msra.mxu0 0.0
    %678 = vmatprep.subr.mxu0 0.0
    %679 = vmatpush2.msra.mxu0 0.0
    %680 = vmatprep.subr.mxu0 0.0
    %681 = vmatpush2.msra.mxu0 0.0
    %682 = vmatprep.subr.mxu0 0.0
    %683 = vmatpush2.msra.mxu0 0.0
    %684 = vmatprep.subr.mxu0 0.0
    %685 = vmatpush2.msra.mxu0 0.0
    %686 = vmatprep.subr.mxu0 0.0
    %687 = vmatpush2.msra.mxu0 0.0
    %688 = vmatprep.subr.mxu0 0.0
    %689 = vmatpush2.msra.mxu0 0.0
    %690 = vmatprep.subr.mxu0 0.0
    %691 = vmatpush2.msra.mxu0 0.0
    %692 = vmatprep.subr.mxu0 0.0
    %693 = vmatpush2.msra.mxu0 0.0
    %694 = vmatprep.subr.mxu0 0.0
    %695 = vmatpush2.msra.mxu0 0.0
    %696 = vmatprep.subr.mxu0 0.0
    %697 = vmatpush2.msra.mxu0 0.0
    %698 = vmatprep.mubr.f32.mxu0 0.0
    %699 = vmatmul.mubr.f32.gmra.mxu0 %v629
    %v700 = vpop.f32.mrf.mxu0
    %v701 = vadd.f32 0.0, %v700
    %v702 = vpop.f32.mrf.mxu0
    %703 = vmatprep.mubr.f32.mxu0 0.0
    %704 = vmatmul.mubr.f32.gmra.mxu0 %v632
    %v705 = vpop.f32.mrf.mxu0
    %v706 = vadd.f32 0.0, %v705
    %v707 = vpop.f32.mrf.mxu0
    %708 = vdwg.mxu0
    %709 = vrot.lane.b32.xlu0 %v107, 104
    %v710 = vpop.permute.xlu0 %709
    %711 = vrot.lane.b32.xlu0 %v108, 104
    %v712 = vpop.permute.xlu0 %711
    %713 = vrot.lane.b32.xlu0 %v107, 72
    %v714 = vpop.permute.xlu0 %713
    %715 = vrot.lane.b32.xlu0 %v108, 72
    %v716 = vpop.permute.xlu0 %715
    %v717 = vsel %vm115, %v710, 0
    %v719 = vsel %vm115, %v712, 0
    %v721 = vsel %vm115, %v714, 0
    %v723 = vsel %vm115, %v716, 0
    %725 = vmatprep.subr.mxu0 0.0
    %726 = vmatpush1.xpose.msra.mxu0 0.0
    %727 = vmatprep.subr.mxu0 0.0
    %728 = vmatpush1.xpose.msra.mxu0 0.0
    %729 = vmatprep.subr.mxu0 0.0
    %730 = vmatpush1.xpose.msra.mxu0 0.0
    %731 = vmatprep.subr.mxu0 0.0
    %732 = vmatpush1.xpose.msra.mxu0 0.0
    %733 = vmatprep.subr.mxu0 0.0
    %734 = vmatpush1.xpose.msra.mxu0 0.0
    %735 = vmatprep.subr.mxu0 0.0
    %736 = vmatpush1.xpose.msra.mxu0 0.0
    %737 = vmatprep.subr.mxu0 0.0
    %738 = vmatpush1.xpose.msra.mxu0 0.0
    %739 = vmatprep.subr.mxu0 0.0
    %740 = vmatpush1.xpose.msra.mxu0 0.0
    %741 = vmatprep.subr.mxu0 0.0
    %742 = vmatpush1.xpose.msra.mxu0 0.0
    %743 = vmatprep.subr.mxu0 0.0
    %744 = vmatpush1.xpose.msra.mxu0 0.0
    %745 = vmatprep.subr.mxu0 0.0
    %746 = vmatpush1.xpose.msra.mxu0 0.0
    %747 = vmatprep.subr.mxu0 0.0
    %748 = vmatpush1.xpose.msra.mxu0 0.0
    %749 = vmatprep.subr.mxu0 0.0
    %750 = vmatpush1.xpose.msra.mxu0 0.0
    %751 = vmatprep.subr.mxu0 0.0
    %752 = vmatpush1.xpose.msra.mxu0 0.0
    %753 = vmatprep.subr.mxu0 0.0
    %754 = vmatpush1.xpose.msra.mxu0 %v723
    %755 = vmatprep.subr.mxu0 0.0
    %756 = vmatpush1.xpose.msra.mxu0 %v721
    %757 = vmatprep.subr.mxu0 0.0
    %758 = vmatpush2.xpose.msra.mxu0 0.0
    %759 = vmatprep.subr.mxu0 0.0
    %760 = vmatpush2.xpose.msra.mxu0 0.0
    %761 = vmatprep.subr.mxu0 0.0
    %762 = vmatpush2.xpose.msra.mxu0 0.0
    %763 = vmatprep.subr.mxu0 0.0
    %764 = vmatpush2.xpose.msra.mxu0 0.0
    %765 = vmatprep.subr.mxu0 0.0
    %766 = vmatpush2.xpose.msra.mxu0 0.0
    %767 = vmatprep.subr.mxu0 0.0
    %768 = vmatpush2.xpose.msra.mxu0 0.0
    %769 = vmatprep.subr.mxu0 0.0
    %770 = vmatpush2.xpose.msra.mxu0 0.0
    %771 = vmatprep.subr.mxu0 0.0
    %772 = vmatpush2.xpose.msra.mxu0 0.0
    %773 = vmatprep.subr.mxu0 0.0
    %774 = vmatpush2.xpose.msra.mxu0 0.0
    %775 = vmatprep.subr.mxu0 0.0
    %776 = vmatpush2.xpose.msra.mxu0 0.0
    %777 = vmatprep.subr.mxu0 0.0
    %778 = vmatpush2.xpose.msra.mxu0 0.0
    %779 = vmatprep.subr.mxu0 0.0
    %780 = vmatpush2.xpose.msra.mxu0 0.0
    %781 = vmatprep.subr.mxu0 0.0
    %782 = vmatpush2.xpose.msra.mxu0 0.0
    %783 = vmatprep.subr.mxu0 0.0
    %784 = vmatpush2.xpose.msra.mxu0 0.0
    %785 = vmatprep.subr.mxu0 0.0
    %786 = vmatpush2.xpose.msra.mxu0 0.0
    %787 = vmatprep.subr.mxu0 0.0
    %788 = vmatpush2.xpose.msra.mxu0 0.0
    %789 = vmatprep.mubr.f32.mxu0 0.0
    %790 = vmatmul.mubr.f32.gmra.mxu0 %v717
    %v791 = vpop.f32.mrf.mxu0
    %v792 = vadd.f32 %v44, %v791
    %v793 = vpop.f32.mrf.mxu0
    %794 = vmatprep.mubr.f32.mxu0 0.0
    %795 = vmatmul.mubr.f32.gmra.mxu0 %v719
    %v796 = vpop.f32.mrf.mxu0
    %v797 = vadd.f32 %v45, %v796
    %v798 = vpop.f32.mrf.mxu0
    %799 = vdwg.mxu0
    %v800 = vsel %vm199, %v792, -inf
    %801 = vmax.xlane.f32.xlu0 %v800
    %v802 = vpop.xlane.xlu0 %801
    %v803 = vsel %vm199, %v797, -inf
    %804 = vmax.xlane.f32.xlu0 %v803
    %v805 = vpop.xlane.xlu0 %804
    %v806 = vsub.f32 %v792, %v802
    %v807 = vsub.f32 %v797, %v805
    %v808 = vmul.f32 %v806, 1.442695
    %v809 = vpow.pop %v808
    %v810 = vmul.f32 %v807, 1.442695
    %v811 = vpow.pop %v810
    %v812 = vsel %vm199, %v809, 0.0
    %813 = vadd.xlane.f32.xlu0 %v812
    %v814 = vpop.xlane.xlu0 %813
    %v815 = vsel %vm199, %v811, 0.0
    %816 = vadd.xlane.f32.xlu0 %v815
    %v817 = vpop.xlane.xlu0 %816
    %v818 = vrcp.pop %v814
    %v819 = vrcp.pop %v817
    %v820 = vmul.f32 %v809, %v818
    %v821 = vmul.f32 %v811, %v819
    %822 = vrot.lane.b32.xlu0 %v107, 40
    %v823 = vpop.permute.xlu0 %822
    %824 = vrot.lane.b32.xlu0 %v108, 40
    %v825 = vpop.permute.xlu0 %824
    %v829 = vsel %vm199, %v820, 0
    %v832 = vsel %vm199, %v821, 0
    %834 = vmatprep.subr.mxu0 0.0
    %835 = vmatpush1.msra.mxu0 0.0
    %836 = vmatprep.subr.mxu0 0.0
    %837 = vmatpush1.msra.mxu0 0.0
    %838 = vmatprep.subr.mxu0 0.0
    %839 = vmatpush1.msra.mxu0 0.0
    %840 = vmatprep.subr.mxu0 0.0
    %841 = vmatpush1.msra.mxu0 0.0
    %842 = vmatprep.subr.mxu0 0.0
    %843 = vmatpush1.msra.mxu0 0.0
    %844 = vmatprep.subr.mxu0 0.0
    %845 = vmatpush1.msra.mxu0 0.0
    %846 = vmatprep.subr.mxu0 0.0
    %847 = vmatpush1.msra.mxu0 0.0
    %848 = vmatprep.subr.mxu0 0.0
    %849 = vmatpush1.msra.mxu0 0.0
    %850 = vmatprep.subr.mxu0 0.0
    %851 = vmatpush1.msra.mxu0 0.0
    %852 = vmatprep.subr.mxu0 0.0
    %853 = vmatpush1.msra.mxu0 0.0
    %854 = vmatprep.subr.mxu0 0.0
    %855 = vmatpush1.msra.mxu0 0.0
    %856 = vmatprep.subr.mxu0 0.0
    %857 = vmatpush1.msra.mxu0 0.0
    %858 = vmatprep.subr.mxu0 0.0
    %859 = vmatpush1.msra.mxu0 0.0
    %860 = vmatprep.subr.mxu0 0.0
    %861 = vmatpush1.msra.mxu0 0.0
    %862 = vmatprep.subr.mxu0 0.0
    %863 = vmatpush1.msra.mxu0 %v825
    %864 = vmatprep.subr.mxu0 0.0
    %865 = vmatpush1.msra.mxu0 %v823
    %866 = vmatprep.subr.mxu0 0.0
    %867 = vmatpush2.msra.mxu0 0.0
    %868 = vmatprep.subr.mxu0 0.0
    %869 = vmatpush2.msra.mxu0 0.0
    %870 = vmatprep.subr.mxu0 0.0
    %871 = vmatpush2.msra.mxu0 0.0
    %872 = vmatprep.subr.mxu0 0.0
    %873 = vmatpush2.msra.mxu0 0.0
    %874 = vmatprep.subr.mxu0 0.0
    %875 = vmatpush2.msra.mxu0 0.0
    %876 = vmatprep.subr.mxu0 0.0
    %877 = vmatpush2.msra.mxu0 0.0
    %878 = vmatprep.subr.mxu0 0.0
    %879 = vmatpush2.msra.mxu0 0.0
    %880 = vmatprep.subr.mxu0 0.0
    %881 = vmatpush2.msra.mxu0 0.0
    %882 = vmatprep.subr.mxu0 0.0
    %883 = vmatpush2.msra.mxu0 0.0
    %884 = vmatprep.subr.mxu0 0.0
    %885 = vmatpush2.msra.mxu0 0.0
    %886 = vmatprep.subr.mxu0 0.0
    %887 = vmatpush2.msra.mxu0 0.0
    %888 = vmatprep.subr.mxu0 0.0
    %889 = vmatpush2.msra.mxu0 0.0
    %890 = vmatprep.subr.mxu0 0.0
    %891 = vmatpush2.msra.mxu0 0.0
    %892 = vmatprep.subr.mxu0 0.0
    %893 = vmatpush2.msra.mxu0 0.0
    %894 = vmatprep.subr.mxu0 0.0
    %895 = vmatpush2.msra.mxu0 0.0
    %896 = vmatprep.subr.mxu0 0.0
    %897 = vmatpush2.msra.mxu0 0.0
    %898 = vmatprep.mubr.f32.mxu0 0.0
    %899 = vmatmul.mubr.f32.gmra.mxu0 %v829
    %v900 = vpop.f32.mrf.mxu0
    %v901 = vadd.f32 0.0, %v900
    %v902 = vpop.f32.mrf.mxu0
    %903 = vmatprep.mubr.f32.mxu0 0.0
    %904 = vmatmul.mubr.f32.gmra.mxu0 %v832
    %v905 = vpop.f32.mrf.mxu0
    %v906 = vadd.f32 0.0, %v905
    %v907 = vpop.f32.mrf.mxu0
    %908 = vdwg.mxu0
    %911 = vrot.lane.b32.xlu0 %v501, 8
    %v912 = vpop.permute.xlu0 %911
    %913 = vrot.lane.b32.xlu0 %v506, 8
    %v914 = vpop.permute.xlu0 %913
    %919 = vrot.lane.b32.xlu0 %v701, 16
    %v920 = vpop.permute.xlu0 %919
    %921 = vrot.lane.b32.xlu0 %v706, 16
    %v922 = vpop.permute.xlu0 %921
    %927 = vrot.lane.b32.xlu0 %v901, 24
    %v928 = vpop.permute.xlu0 %927
    %929 = vrot.lane.b32.xlu0 %v906, 24
    %v930 = vpop.permute.xlu0 %929
    %v933 = vsel %vm115, %v301, %v912
    %v934 = vsel %vm115, %v306, %v914
    %v935 = vsel %vm199, %v933, %v920
    %v936 = vsel %vm199, %v934, %v922
    %vm937 = vcmask 195584
    %v938 = vsel %vm937, %v935, %v928
    %v939 = vsel %vm937, %v936, %v930
    %v940 = vpack.c.bf16 %v939, %v938
    %v941 = vlaneseq
    %v942 = vshrl.u32 %v941, 7
    %v943 = vsub.s32 1, %v942
    %v944 = vrot.slane %v43, %v943
    %945 = vrot.lane.b32.xlu0 %v54, 32
    %v946 = vpop.permute.xlu0 %945
    %947 = vrot.lane.b32.xlu0 %v55, 32
    %v948 = vpop.permute.xlu0 %947
    %v952 = vsel %vm58, %v940, 0
    %954 = vmatprep.subr.bf16.mxu0 0
    %955 = vmatpush1.bf16.msra.mxu0 0
    %956 = vmatprep.subr.bf16.mxu0 0
    %957 = vmatpush1.bf16.msra.mxu0 0
    %958 = vmatprep.subr.bf16.mxu0 0
    %959 = vmatpush1.bf16.msra.mxu0 0
    %960 = vmatprep.subr.bf16.mxu0 0
    %961 = vmatpush1.bf16.msra.mxu0 0
    %962 = vmatprep.subr.bf16.mxu0 0
    %963 = vmatpush1.bf16.msra.mxu0 0
    %964 = vmatprep.subr.bf16.mxu0 0
    %965 = vmatpush1.bf16.msra.mxu0 0
    %966 = vmatprep.subr.bf16.mxu0 0
    %967 = vmatpush1.bf16.msra.mxu0 %v948
    %968 = vmatprep.subr.bf16.mxu0 0
    %969 = vmatpush1.bf16.msra.mxu0 %v946
    %970 = vmatprep.subr.bf16.mxu0 0
    %971 = vmatpush2.bf16.msra.mxu0 0
    %972 = vmatprep.subr.bf16.mxu0 0
    %973 = vmatpush2.bf16.msra.mxu0 0
    %974 = vmatprep.subr.bf16.mxu0 0
    %975 = vmatpush2.bf16.msra.mxu0 0
    %976 = vmatprep.subr.bf16.mxu0 0
    %977 = vmatpush2.bf16.msra.mxu0 0
    %978 = vmatprep.subr.bf16.mxu0 0
    %979 = vmatpush2.bf16.msra.mxu0 0
    %980 = vmatprep.subr.bf16.mxu0 0
    %981 = vmatpush2.bf16.msra.mxu0 0
    %982 = vmatprep.subr.bf16.mxu0 0
    %983 = vmatpush2.bf16.msra.mxu0 0
    %984 = vmatprep.subr.bf16.mxu0 0
    %985 = vmatpush2.bf16.msra.mxu0 0
    %986 = vmatprep.mubr.bf16.mxu0 0
    %987 = vmatmul.mubr.bf16.gmra.mxu0 %v952
    %v988 = vpop.f32.mrf.mxu0
    %v989 = vadd.f32 %v944, %v988
    %v990 = vpop.f32.mrf.mxu0
    %v991 = vpop.f32.mrf.mxu0
    %v992 = vadd.f32 %v944, %v991
    %v993 = vpop.f32.mrf.mxu0
    %994 = vdwg.mxu0
    %v995 = vadd.f32 %v36, %v989
    %v996 = vadd.f32 %v37, %v992
    %v997 = vsel %vm58, %v995, 0.0
    %998 = vadd.xlane.f32.xlu0 %v997
    %v999 = vpop.xlane.xlu0 %998
    %v1000 = vsel %vm58, %v996, 0.0
    %1001 = vadd.xlane.f32.xlu0 %v1000
    %v1002 = vpop.xlane.xlu0 %1001
    %v1003 = vrcp.pop 32.0
    %v1004 = vmul.f32 %v999, %v1003
    %v1005 = vmul.f32 %v1002, %v1003
    %v1006 = vsub.f32 %v995, %v1004
    %v1007 = vsub.f32 %v996, %v1005
    %v1008 = vmul.f32 %v1006, %v1006
    %v1009 = vmul.f32 %v1007, %v1007
    %v1010 = vsel %vm58, %v1008, 0.0
    %1011 = vadd.xlane.f32.xlu0 %v1010
    %v1012 = vpop.xlane.xlu0 %1011
    %v1013 = vsel %vm58, %v1009, 0.0
    %1014 = vadd.xlane.f32.xlu0 %v1013
    %v1015 = vpop.xlane.xlu0 %1014
    %v1016 = vmul.f32 %v1012, %v1003
    %v1017 = vmul.f32 %v1015, %v1003
    %v1018 = vadd.f32 %v1016, 1e-05
    %v1019 = vadd.f32 %v1017, 1e-05
    %v1020 = vrsqrt.pop %v1018
    %v1021 = vrsqrt.pop %v1019
    %v1022 = vmul.f32 %v1006, %v1020
    %v1023 = vmul.f32 %v1007, %v1021
    %v1024 = vlaneseq
    %v1025 = vshrl.u32 %v1024, 7
    %v1026 = vsub.s32 4, %v1025
    %v1027 = vrot.slane %v43, %v1026
    %v1028 = vmul.f32 %v1022, %v1027
    %v1029 = vmul.f32 %v1023, %v1027
    %v1030 = vlaneseq
    %v1031 = vshrl.u32 %v1030, 7
    %v1032 = vsub.s32 5, %v1031
    %v1033 = vrot.slane %v43, %v1032
    %v1034 = vadd.f32 %v1028, %v1033
    %v1035 = vadd.f32 %v1029, %v1033
    %v1036 = vpack.c.bf16 %v1035, %v1034
    %v1037 = vld [vmem:[#allocation2] sm:$0xf]
    %v1038 = vld [vmem:[#allocation2 + $0x4] sm:$0xf]
    %v1039 = vld [vmem:[#allocation2 + $0x8] sm:$0xf]
    %v1040 = vld [vmem:[#allocation2 + $0xc] sm:$0xf]
    %v1041 = vlaneseq
    %v1042 = vshrl.u32 %v1041, 7
    %v1043 = vsub.s32 2, %v1042
    %v1044 = vrot.slane %v43, %v1043
    %v1049 = vunpack.c.l.b16 %v1037
    %v1050 = vunpack.c.l.b16 %v1038
    %v1051 = vunpack.c.l.b16 %v1039
    %v1052 = vunpack.c.l.b16 %v1040
    %v1053 = vpack.c.b16 %v1050, %v1049
    %v1054 = vpack.c.b16 %v1052, %v1051
    %v1058 = vsel %vm58, %v1036, 0
    %1060 = vmatprep.subr.bf16.mxu0 0
    %1061 = vmatpush1.bf16.msra.mxu0 0
    %1062 = vmatprep.subr.bf16.mxu0 0
    %1063 = vmatpush1.bf16.msra.mxu0 0
    %1064 = vmatprep.subr.bf16.mxu0 0
    %1065 = vmatpush1.bf16.msra.mxu0 0
    %1066 = vmatprep.subr.bf16.mxu0 0
    %1067 = vmatpush1.bf16.msra.mxu0 0
    %1068 = vmatprep.subr.bf16.mxu0 0
    %1069 = vmatpush1.bf16.msra.mxu0 0
    %1070 = vmatprep.subr.bf16.mxu0 0
    %1071 = vmatpush1.bf16.msra.mxu0 0
    %1072 = vmatprep.subr.bf16.mxu0 0
    %1073 = vmatpush1.bf16.msra.mxu0 %v1054
    %1074 = vmatprep.subr.bf16.mxu0 0
    %1075 = vmatpush1.bf16.msra.mxu0 %v1053
    %1076 = vmatprep.subr.bf16.mxu0 0
    %1077 = vmatpush2.bf16.msra.mxu0 0
    %1078 = vmatprep.subr.bf16.mxu0 0
    %1079 = vmatpush2.bf16.msra.mxu0 0
    %1080 = vmatprep.subr.bf16.mxu0 0
    %1081 = vmatpush2.bf16.msra.mxu0 0
    %1082 = vmatprep.subr.bf16.mxu0 0
    %1083 = vmatpush2.bf16.msra.mxu0 0
    %1084 = vmatprep.subr.bf16.mxu0 0
    %1085 = vmatpush2.bf16.msra.mxu0 0
    %1086 = vmatprep.subr.bf16.mxu0 0
    %1087 = vmatpush2.bf16.msra.mxu0 0
    %1088 = vmatprep.subr.bf16.mxu0 0
    %1089 = vmatpush2.bf16.msra.mxu0 0
    %1090 = vmatprep.subr.bf16.mxu0 0
    %1091 = vmatpush2.bf16.msra.mxu0 0
    %1092 = vmatprep.mubr.bf16.mxu0 0
    %1093 = vmatmul.mubr.bf16.gmra.mxu0 %v1058
    %v1094 = vpop.f32.mrf.mxu0
    %v1095 = vadd.f32 %v1044, %v1094
    %v1096 = vpop.f32.mrf.mxu0
    %v1097 = vpop.f32.mrf.mxu0
    %v1098 = vadd.f32 %v1044, %v1097
    %v1099 = vpop.f32.mrf.mxu0
    %1100 = vdwg.mxu0
    %v1101 = vmax.f32 %v1095, 0.0
    %v1102 = vmax.f32 %v1098, 0.0
    %v1103 = vpack.c.bf16 %v1102, %v1101
    %v1104 = vld [vmem:[%s3] sm:$0xf]
    %v1105 = vld [vmem:[%s3 + $0x4] sm:$0xf]
    %v1106 = vld [vmem:[%s3 + $0x8] sm:$0xf]
    %v1107 = vld [vmem:[%s3 + $0xc] sm:$0xf]
    %v1108 = vld [vmem:[%s3 + $0x10] sm:$0xf]
    %v1109 = vld [vmem:[%s3 + $0x14] sm:$0xf]
    %v1110 = vld [vmem:[%s3 + $0x18] sm:$0xf]
    %v1111 = vld [vmem:[%s3 + $0x1c] sm:$0xf]
    %v1112 = vlaneseq
    %v1113 = vshrl.u32 %v1112, 7
    %v1114 = vsub.s32 3, %v1113
    %v1115 = vrot.slane %v43, %v1114
    %v1124 = vunpack.c.l.b16 %v1104
    %v1125 = vunpack.c.l.b16 %v1105
    %v1126 = vunpack.c.l.b16 %v1106
    %v1127 = vunpack.c.l.b16 %v1107
    %v1128 = vunpack.c.l.b16 %v1108
    %v1129 = vunpack.c.l.b16 %v1109
    %v1130 = vunpack.c.l.b16 %v1110
    %v1131 = vunpack.c.l.b16 %v1111
    %v1132 = vpack.c.b16 %v1125, %v1124
    %v1133 = vpack.c.b16 %v1127, %v1126
    %v1134 = vpack.c.b16 %v1129, %v1128
    %v1135 = vpack.c.b16 %v1131, %v1130
    %vm1140 = vcmask 523264
    %v1142 = vsel %vm1140, %v1103, 0
    %1144 = vmatprep.subr.bf16.mxu0 0
    %1145 = vmatpush1.bf16.msra.mxu0 0
    %1146 = vmatprep.subr.bf16.mxu0 0
    %1147 = vmatpush1.bf16.msra.mxu0 0
    %1148 = vmatprep.subr.bf16.mxu0 0
    %1149 = vmatpush1.bf16.msra.mxu0 0
    %1150 = vmatprep.subr.bf16.mxu0 0
    %1151 = vmatpush1.bf16.msra.mxu0 0
    %1152 = vmatprep.subr.bf16.mxu0 0
    %1153 = vmatpush1.bf16.msra.mxu0 %v1135
    %1154 = vmatprep.subr.bf16.mxu0 0
    %1155 = vmatpush1.bf16.msra.mxu0 %v1134
    %1156 = vmatprep.subr.bf16.mxu0 0
    %1157 = vmatpush1.bf16.msra.mxu0 %v1133
    %1158 = vmatprep.subr.bf16.mxu0 0
    %1159 = vmatpush1.bf16.msra.mxu0 %v1132
    %1160 = vmatprep.subr.bf16.mxu0 0
    %1161 = vmatpush2.bf16.msra.mxu0 0
    %1162 = vmatprep.subr.bf16.mxu0 0
    %1163 = vmatpush2.bf16.msra.mxu0 0
    %1164 = vmatprep.subr.bf16.mxu0 0
    %1165 = vmatpush2.bf16.msra.mxu0 0
    %1166 = vmatprep.subr.bf16.mxu0 0
    %1167 = vmatpush2.bf16.msra.mxu0 0
    %1168 = vmatprep.subr.bf16.mxu0 0
    %1169 = vmatpush2.bf16.msra.mxu0 0
    %1170 = vmatprep.subr.bf16.mxu0 0
    %1171 = vmatpush2.bf16.msra.mxu0 0
    %1172 = vmatprep.subr.bf16.mxu0 0
    %1173 = vmatpush2.bf16.msra.mxu0 0
    %1174 = vmatprep.subr.bf16.mxu0 0
    %1175 = vmatpush2.bf16.msra.mxu0 0
    %1176 = vmatprep.mubr.bf16.mxu0 0
    %1177 = vmatmul.mubr.bf16.gmra.mxu0 %v1142
    %v1178 = vpop.f32.mrf.mxu0
    %v1179 = vadd.f32 %v1115, %v1178
    %v1180 = vpop.f32.mrf.mxu0
    %v1181 = vpop.f32.mrf.mxu0
    %v1182 = vadd.f32 %v1115, %v1181
    %v1183 = vpop.f32.mrf.mxu0
    %1184 = vdwg.mxu0
    %v1185 = vadd.f32 %v1034, %v1179
    %v1186 = vadd.f32 %v1035, %v1182
    %v1187 = vsel %vm58, %v1185, 0.0
    %1188 = vadd.xlane.f32.xlu0 %v1187
    %v1189 = vpop.xlane.xlu0 %1188
    %v1190 = vsel %vm58, %v1186, 0.0
    %1191 = vadd.xlane.f32.xlu0 %v1190
    %v1192 = vpop.xlane.xlu0 %1191
    %v1193 = vmul.f32 %v1189, %v1003
    %v1194 = vmul.f32 %v1192, %v1003
    %v1195 = vsub.f32 %v1185, %v1193
    %v1196 = vsub.f32 %v1186, %v1194
    %v1197 = vmul.f32 %v1195, %v1195
    %v1198 = vmul.f32 %v1196, %v1196
    %v1199 = vsel %vm58, %v1197, 0.0
    %1200 = vadd.xlane.f32.xlu0 %v1199
    %v1201 = vpop.xlane.xlu0 %1200
    %v1202 = vsel %vm58, %v1198, 0.0
    %1203 = vadd.xlane.f32.xlu0 %v1202
    %v1204 = vpop.xlane.xlu0 %1203
    %v1205 = vmul.f32 %v1201, %v1003
    %v1206 = vmul.f32 %v1204, %v1003
    %v1207 = vadd.f32 %v1205, 1e-05
    %v1208 = vadd.f32 %v1206, 1e-05
    %v1209 = vrsqrt.pop %v1207
    %v1210 = vrsqrt.pop %v1208
    %v1211 = vmul.f32 %v1195, %v1209
    %v1212 = vmul.f32 %v1196, %v1210
    %v1213 = vlaneseq
    %v1214 = vshrl.u32 %v1213, 7
    %v1215 = vsub.s32 6, %v1214
    %v1216 = vrot.slane %v43, %v1215
    %v1217 = vmul.f32 %v1211, %v1216
    %v1218 = vmul.f32 %v1212, %v1216
    %v1219 = vlaneseq
    %v1220 = vshrl.u32 %v1219, 7
    %v1221 = vsub.s32 7, %v1220
    %v1222 = vrot.slane %v43, %v1221
    %v1223 = vadd.f32 %v1217, %v1222
    %v1224 = vadd.f32 %v1218, %v1222
    %1225 = vst.msk [vmem:[#allocation5] sm:$0xff] %vm58, %v1223
    %1226 = vst.msk [vmem:[#allocation5 + $0x8] sm:$0xff] %vm58, %v1224
    // Predicated region
    $region26: #{encoder_layer.1} parent=1 // pred_check
      _
    $region27: #{encoder_layer.1} parent=1 // pred_check_branch
      %1228 = sbr.rel (0) target = $region29
    $region28: #{encoder_layer.1} parent=1 // pred_region
      %s1230 = ssub.s32 256, 256
      %1231 = vsyncadd [#allocation4], %s1230
      %s1232 = sshll.u32 [#allocation5], 4
      %s1233 = int_to_ptr.vmem [resolvable:$true] %s1232
      %1238 = dma.vmem_to_hbm [thread:$0]  %s1233, 256, %s5, [#allocation4], 128, 128, 8
    $region29: #{encoder_layer.1} parent=1 // pred_fallthru
      _
    // Predicated region
    $region30: #{encoder_layer.1} parent=1 // pred_check
      _
    $region31: #{encoder_layer.1} parent=1 // pred_check_branch
      %1240 = sbr.rel (0) target = $region33
    $region32: #{encoder_layer.1} parent=1 // pred_region
      %1241 = dma.done [#allocation4], 256
    $region33: #{encoder_layer.1} parent=1 // pred_fallthru
      _
    %1242 = vsyncpa [#allocation3], 1
    %1243 = vsyncpa [#allocation4], 1

</llo_original>
